<compile_context>
chip_gen: v6e
topology: v6e:2x2x1
jax: 0.10.0
libtpu: 0.0.40
codegen_flags: <defaults>
</compile_context>

<pallas_src>
import math
import jax
import jax.numpy as jnp
from jax.experimental import pallas as pl
from jax.experimental.pallas import tpu as pltpu

# ------------------------- small, consistent config -------------------------
DIM = 64            # args.dim
N_HEADS = 4         # args.n_heads
HEAD_DIM = DIM // N_HEADS
MULTIPLE_OF = 32    # args.multiple_of
EPS = 1e-5          # args.norm_epsilon
BATCH = 2
SEQ = 8


def _ffn_hidden_dim(dim: int, multiple_of: int) -> int:
    hidden = int(2 * (4 * dim) / 3)
    return multiple_of * ((hidden + multiple_of - 1) // multiple_of)


HIDDEN = _ffn_hidden_dim(DIM, MULTIPLE_OF)            # 192 for dim=64, multiple_of=32
HID_PAD = ((HIDDEN + 127) // 128) * 128               # 256: lane-aligned half width


# ------------------------------- fused kernel --------------------------------
def _make_encoder_kernel(batch: int, seq: int, dim: int, n_heads: int):
    head_dim = dim // n_heads
    inv_sqrt_hd = 1.0 / math.sqrt(head_dim)
    n_rows = batch * seq

    def kernel(x_ref, trig_ref, vecs_ref, wqkv_ref, wo_ref, w12_ref, b12_ref, w3p_ref,
               o_ref):
        x = x_ref[...]                                      # (N, D) f32
        vecs = vecs_ref[...]                                # (8, D) packed row-vectors
        n1s, n1b = vecs[0:1, :], vecs[1:2, :]
        n2s, n2b = vecs[2:3, :], vecs[3:4, :]
        b3 = vecs[4:5, :]

        # ---------- RMSNorm1 (f32 elementwise; rsqrt on EUP) ----------
        ms = jnp.mean(x * x, axis=-1, keepdims=True)
        xn = x * jax.lax.rsqrt(ms + EPS) * n1s + n1b
        xn_bf = xn.astype(jnp.bfloat16)

        # ---------- single fused [q|k|q_rot|k_rot|v|pad] projection ----------
        qkv = jnp.dot(xn_bf, wqkv_ref[...], preferred_element_type=jnp.float32)  # (N,6D)

        # ---------- RoPE: rotation folded into weights, whole-vreg VPU combine ----------
        trig = trig_ref[...]                                # (N, 4D) = [cos|cos|sin|sin]
        cs = trig[:, 0:2 * dim]
        ss = trig[:, 2 * dim:4 * dim]
        qk = qkv[:, 0:2 * dim] * cs + qkv[:, 2 * dim:4 * dim] * ss   # rotated [q | k]
        v = qkv[:, 4 * dim:5 * dim]

        qk3 = qk.reshape(batch, seq, 2 * dim).astype(jnp.bfloat16)
        v3 = v.reshape(batch, seq, dim).astype(jnp.bfloat16)

        # ---------- attention: per-head scores (static loop), softmax batched over heads ----------
        scores = []
        for h in range(n_heads):
            qh = qk3[:, :, h * head_dim:(h + 1) * head_dim]
            kh = qk3[:, :, dim + h * head_dim: dim + (h + 1) * head_dim]
            scores.append(jnp.einsum('bqd,bkd->bqk', qh, kh,
                                     preferred_element_type=jnp.float32))
        s = jnp.stack(scores, axis=0) * inv_sqrt_hd          # (H, B, S, S)
        s = s - jnp.max(s, axis=-1, keepdims=True)
        p = jnp.exp(s)
        p = p * pl.reciprocal(jnp.sum(p, axis=-1, keepdims=True), approx=True)
        p_bf = p.astype(jnp.bfloat16)

        heads = [jnp.einsum('bqk,bkd->bqd', p_bf[h],
                            v3[:, :, h * head_dim:(h + 1) * head_dim],
                            preferred_element_type=jnp.float32)
                 for h in range(n_heads)]
        o_att = jnp.concatenate(heads, axis=-1).reshape(n_rows, dim)   # (N, D)

        # single output projection + residual
        hres = x + jnp.dot(o_att.astype(jnp.bfloat16), wo_ref[...],
                           preferred_element_type=jnp.float32)

        # ---------- RMSNorm2 + fused SwiGLU FFN + residual ----------
        ms2 = jnp.mean(hres * hres, axis=-1, keepdims=True)
        hn = hres * jax.lax.rsqrt(ms2 + EPS) * n2s + n2b
        hn_bf = hn.astype(jnp.bfloat16)

        # one matmul for both up-projections; halves padded to 128-lane boundaries
        a12 = jnp.dot(hn_bf, w12_ref[...], preferred_element_type=jnp.float32) + b12_ref[...]
        a = a12[:, 0:HID_PAD]                               # fc1 pre-act (pad cols == 0)
        xv = a12[:, HID_PAD:2 * HID_PAD]                    # fc2 output
        g = (a * jax.nn.sigmoid(a)) * xv                    # SiLU gate * value; pad cols stay 0
        y = jnp.dot(g.astype(jnp.bfloat16), w3p_ref[...],
                    preferred_element_type=jnp.float32) + b3

        o_ref[...] = hres + y

    return kernel


# ------------------------------- wrapper -------------------------------------
def _fold_rotation(w_t):
    """W_rot such that x @ W_rot == interleaved-rotate(x @ W_t):
       out[2j] = -(x@W)[2j+1],  out[2j+1] = (x@W)[2j]."""
    d_in, d_out = w_t.shape
    w = w_t.reshape(d_in, d_out // 2, 2)
    return jnp.stack([-w[..., 1], w[..., 0]], axis=-1).reshape(d_in, d_out)


def prepare_encoder_inputs(params, cos, sin, batch):
    """One-time packing of weights / biases / trig tables (hoisted out of the hot path)."""
    bf = jnp.bfloat16
    f32 = jnp.float32
    D, H, HP = DIM, HIDDEN, HID_PAD

    wq, wk, wv = params["wq_t"], params["wk_t"], params["wv_t"]
    # [q | k | q_rot | k_rot | v | pad]  ->  (D, 6D), lane-aligned 128-wide groups
    wqkv = jnp.concatenate(
        [wq, wk, _fold_rotation(wq), _fold_rotation(wk), wv, jnp.zeros((D, D), f32)],
        axis=1).astype(bf)
    wo = params["wo_t"].astype(bf)

    hpad = jnp.zeros((D, HP - H), f32)
    w12 = jnp.concatenate([params["w1_t"], hpad, params["w2_t"], hpad], axis=1).astype(bf)
    b12 = jnp.concatenate([params["b1"], jnp.zeros((1, HP - H), f32),
                           params["b2"], jnp.zeros((1, HP - H), f32)], axis=1)
    w3p = jnp.concatenate([params["w3_t"], jnp.zeros((HP - H, D), f32)], axis=0).astype(bf)

    # packed row-vectors: [n1_scale, n1_bias, n2_scale, n2_bias, b3, 0, 0, 0]  (8, D)
    vecs = jnp.concatenate([params["n1_scale"], params["n1_bias"],
                            params["n2_scale"], params["n2_bias"],
                            params["b3"], jnp.zeros((3, D), f32)], axis=0)

    # RoPE tables, interleaved layout, tiled over heads (cols) and batch (rows)
    cs = jnp.tile(jnp.repeat(cos, 2, axis=-1), (batch, N_HEADS))     # (B*S, D)
    ss = jnp.tile(jnp.repeat(sin, 2, axis=-1), (batch, N_HEADS))     # (B*S, D)
    trig = jnp.concatenate([cs, cs, ss, ss], axis=1)                 # (B*S, 4D)

    return dict(wqkv=wqkv, wo=wo, w12=w12, b12=b12, w3p=w3p, vecs=vecs, trig=trig)


@jax.jit
def encoder_block_pallas(x, packed):
    B, S, D = x.shape
    N = B * S
    vmem = pl.BlockSpec(memory_space=pltpu.MemorySpace.VMEM)
    kernel = _make_encoder_kernel(B, S, D, N_HEADS)

    out = pl.pallas_call(
        kernel,
        out_shape=jax.ShapeDtypeStruct((N, D), jnp.float32),
        in_specs=[vmem] * 8,
        out_specs=vmem,
    )(x.reshape(N, D), packed["trig"], packed["vecs"], packed["wqkv"],
      packed["wo"], packed["w12"], packed["b12"], packed["w3p"])
    return out.reshape(B, S, D)


# --------------------------- pure-JAX f32 reference ---------------------------
def _rope_interleaved(x, cos, sin):
    # x: (B, S, H, hd); cos/sin: (S, hd//2). PyTorch complex-pair formulation.
    xr = x.reshape(*x.shape[:-1], HEAD_DIM // 2, 2)
    x0, x1 = xr[..., 0], xr[..., 1]
    c = cos[None, :, None, :]
    s = sin[None, :, None, :]
    r0 = x0 * c - x1 * s
    r1 = x0 * s + x1 * c
    return jnp.stack([r0, r1], axis=-1).reshape(x.shape)


def encoder_block_reference(x, params, cos, sin):
    B, S, D = x.shape

    def rms(t, scale, bias):
        return t / jnp.sqrt(jnp.mean(t * t, -1, keepdims=True) + EPS) * scale + bias

    xn = rms(x, params["n1_scale"], params["n1_bias"])
    q = (xn @ params["wq_t"]).reshape(B, S, N_HEADS, HEAD_DIM)
    k = (xn @ params["wk_t"]).reshape(B, S, N_HEADS, HEAD_DIM)
    v = (xn @ params["wv_t"]).reshape(B, S, N_HEADS, HEAD_DIM)
    q = _rope_interleaved(q, cos, sin)
    k = _rope_interleaved(k, cos, sin)
    q, k, v = (t.transpose(0, 2, 1, 3) for t in (q, k, v))          # (B, H, S, hd)
    attn = (q @ k.transpose(0, 1, 3, 2)) / math.sqrt(HEAD_DIM)
    attn = jax.nn.softmax(attn, axis=-1)
    o = (attn @ v).transpose(0, 2, 1, 3).reshape(B, S, D)
    h = x + o @ params["wo_t"]

    hn = rms(h, params["n2_scale"], params["n2_bias"])
    a = hn @ params["w1_t"] + params["b1"]
    swish = a * jax.nn.sigmoid(a)
    g = swish * (hn @ params["w2_t"] + params["b2"])
    return h + g @ params["w3_t"] + params["b3"]


# ------------------------------- param init -----------------------------------
def init_params(key):
    ks = jax.random.split(key, 8)
    f32 = jnp.float32

    def w(k, shape, scale=0.05):
        return jax.random.normal(k, shape, dtype=f32) * scale

    return {
        # RMSNorm params (module inits scale=1, bias=0); stored as (1, D) rows
        "n1_scale": jnp.ones((1, DIM), f32),
        "n1_bias": jnp.zeros((1, DIM), f32),
        "n2_scale": jnp.ones((1, DIM), f32),
        "n2_bias": jnp.zeros((1, DIM), f32),
        # attention projections, (in, out) layout, no bias
        "wq_t": w(ks[0], (DIM, DIM)),
        "wk_t": w(ks[1], (DIM, DIM)),
        "wv_t": w(ks[2], (DIM, DIM)),
        "wo_t": w(ks[3], (DIM, DIM)),
        # SwiGLU FFN, (in, out) layout, with bias (nn.Linear default)
        "w1_t": w(ks[4], (DIM, HIDDEN)),
        "b1": w(ks[5], (1, HIDDEN), 0.01),
        "w2_t": w(ks[6], (DIM, HIDDEN)),
        "b2": jnp.zeros((1, HIDDEN), f32),
        "w3_t": w(ks[7], (HIDDEN, DIM)),
        "b3": jnp.zeros((1, DIM), f32),
    }


def make_freqs(seq_len, head_dim, start_pos=0, theta=10000.0):
    inv = 1.0 / (theta ** (jnp.arange(0, head_dim, 2, dtype=jnp.float32) / head_dim))
    pos = jnp.arange(start_pos, start_pos + seq_len, dtype=jnp.float32)
    ang = jnp.outer(pos, inv)                            # (S, hd//2)
    return jnp.cos(ang), jnp.sin(ang)


# --------------------------------- main ----------------------------------------
if __name__ == "__main__":
    key = jax.random.PRNGKey(0)
    kx, kp = jax.random.split(key)

    x = jax.random.normal(kx, (BATCH, SEQ, DIM), dtype=jnp.float32)
    params = init_params(kp)
    cos, sin = make_freqs(SEQ, HEAD_DIM, start_pos=0)

    # one-time weight packing (hoisted out of the per-call path)
    packed = prepare_encoder_inputs(params, cos, sin, BATCH)

    out = jax.block_until_ready(encoder_block_pallas(x, packed))
    ref = jax.block_until_ready(encoder_block_reference(x, params, cos, sin))

    assert out.shape == (BATCH, SEQ, DIM)
    # bf16 MXU inputs (f32 accumulation) + approx softmax reciprocal vs. full-f32
    # reference: tolerance relaxed accordingly (observed error is well below this).
    assert jnp.allclose(out, ref, atol=2e-2, rtol=2e-2), float(jnp.max(jnp.abs(out - ref)))

    print("KERNEL_OK")
</pallas_src>

<mosaic_0001>
module attributes {stable_mosaic.version = 11 : i64} {
  func.func @kernel(%arg0: memref<16x64xf32, #tpu.memory_space<vmem>>, %arg1: memref<16x256xf32, #tpu.memory_space<vmem>>, %arg2: memref<8x64xf32, #tpu.memory_space<vmem>>, %arg3: memref<64x384xbf16, #tpu.memory_space<vmem>>, %arg4: memref<64x64xbf16, #tpu.memory_space<vmem>>, %arg5: memref<64x512xbf16, #tpu.memory_space<vmem>>, %arg6: memref<1x512xf32, #tpu.memory_space<vmem>>, %arg7: memref<256x64xbf16, #tpu.memory_space<vmem>>, %arg8: memref<16x64xf32, #tpu.memory_space<vmem>>) attributes {dimension_semantics = [], scalar_prefetch = 0 : i64, scratch_operands = 0 : i64, tpu.core_type = #tpu.core_type<tc>} {
    %c0 = arith.constant 0 : index
    %c0_0 = arith.constant 0 : index
    %0 = vector.load %arg0[%c0, %c0_0] : memref<16x64xf32, #tpu.memory_space<vmem>>, vector<16x64xf32>
    %c0_1 = arith.constant 0 : index
    %c0_2 = arith.constant 0 : index
    %1 = vector.load %arg2[%c0_1, %c0_2] : memref<8x64xf32, #tpu.memory_space<vmem>>, vector<8x64xf32>
    %2 = vector.extract_strided_slice %1 {offsets = [0, 0], sizes = [1, 64], strides = [1, 1]} : vector<8x64xf32> to vector<1x64xf32>
    %3 = vector.extract_strided_slice %1 {offsets = [1, 0], sizes = [1, 64], strides = [1, 1]} : vector<8x64xf32> to vector<1x64xf32>
    %4 = vector.extract_strided_slice %1 {offsets = [2, 0], sizes = [1, 64], strides = [1, 1]} : vector<8x64xf32> to vector<1x64xf32>
    %5 = vector.extract_strided_slice %1 {offsets = [3, 0], sizes = [1, 64], strides = [1, 1]} : vector<8x64xf32> to vector<1x64xf32>
    %6 = vector.extract_strided_slice %1 {offsets = [4, 0], sizes = [1, 64], strides = [1, 1]} : vector<8x64xf32> to vector<1x64xf32>
    %7 = arith.mulf %0, %0 : vector<16x64xf32>
    %cst = arith.constant dense<0.000000e+00> : vector<16xf32>
    %8 = vector.multi_reduction <add>, %7, %cst [1] : vector<16x64xf32> to vector<16xf32>
    %9 = vector.shape_cast %8 : vector<16xf32> to vector<16x1xf32>
    %cst_3 = arith.constant 6.400000e+01 : f32
    %10 = vector.broadcast %cst_3 : f32 to vector<16x1xf32>
    %11 = arith.divf %9, %10 : vector<16x1xf32>
    %cst_4 = arith.constant 9.99999974E-6 : f32
    %12 = vector.broadcast %cst_4 : f32 to vector<16x1xf32>
    %13 = arith.addf %11, %12 : vector<16x1xf32>
    %14 = math.rsqrt %13 : vector<16x1xf32>
    %15 = vector.broadcast %14 : vector<16x1xf32> to vector<16x64xf32>
    %16 = arith.mulf %0, %15 : vector<16x64xf32>
    %17 = vector.broadcast %2 : vector<1x64xf32> to vector<16x64xf32>
    %18 = arith.mulf %16, %17 : vector<16x64xf32>
    %19 = vector.broadcast %3 : vector<1x64xf32> to vector<16x64xf32>
    %20 = arith.addf %18, %19 : vector<16x64xf32>
    %21 = arith.truncf %20 : vector<16x64xf32> to vector<16x64xbf16>
    %c0_5 = arith.constant 0 : index
    %c0_6 = arith.constant 0 : index
    %22 = vector.load %arg3[%c0_5, %c0_6] : memref<64x384xbf16, #tpu.memory_space<vmem>>, vector<64x384xbf16>
    %cst_7 = arith.constant dense<0.000000e+00> : vector<16x384xf32>
    %23 = tpu.matmul %21, %22, %cst_7 {dimension_numbers = #tpu.dot_dimension_numbers<[1], [0], [0], [1], [0, 0, 1, 1], [], []>} : vector<16x64xbf16>, vector<64x384xbf16>, vector<16x384xf32> -> vector<16x384xf32>
    %c0_8 = arith.constant 0 : index
    %c0_9 = arith.constant 0 : index
    %24 = vector.load %arg1[%c0_8, %c0_9] : memref<16x256xf32, #tpu.memory_space<vmem>>, vector<16x256xf32>
    %25 = vector.extract_strided_slice %24 {offsets = [0, 0], sizes = [16, 128], strides = [1, 1]} : vector<16x256xf32> to vector<16x128xf32>
    %26 = vector.extract_strided_slice %24 {offsets = [0, 128], sizes = [16, 128], strides = [1, 1]} : vector<16x256xf32> to vector<16x128xf32>
    %27 = vector.extract_strided_slice %23 {offsets = [0, 0], sizes = [16, 128], strides = [1, 1]} : vector<16x384xf32> to vector<16x128xf32>
    %28 = arith.mulf %27, %25 : vector<16x128xf32>
    %29 = vector.extract_strided_slice %23 {offsets = [0, 128], sizes = [16, 128], strides = [1, 1]} : vector<16x384xf32> to vector<16x128xf32>
    %30 = arith.mulf %29, %26 : vector<16x128xf32>
    %31 = arith.addf %28, %30 : vector<16x128xf32>
    %32 = vector.extract_strided_slice %23 {offsets = [0, 256], sizes = [16, 64], strides = [1, 1]} : vector<16x384xf32> to vector<16x64xf32>
    %33 = vector.shape_cast %31 : vector<16x128xf32> to vector<2x8x128xf32>
    %34 = arith.truncf %33 : vector<2x8x128xf32> to vector<2x8x128xbf16>
    %35 = vector.shape_cast %32 : vector<16x64xf32> to vector<2x8x64xf32>
    %36 = arith.truncf %35 : vector<2x8x64xf32> to vector<2x8x64xbf16>
    %37 = vector.extract_strided_slice %34 {offsets = [0, 0, 0], sizes = [2, 8, 16], strides = [1, 1, 1]} : vector<2x8x128xbf16> to vector<2x8x16xbf16>
    %38 = vector.extract_strided_slice %34 {offsets = [0, 0, 64], sizes = [2, 8, 16], strides = [1, 1, 1]} : vector<2x8x128xbf16> to vector<2x8x16xbf16>
    "tpu.trace_start"() <{level = 10 : i32, message = "bqd,bkd->bqk"}> : () -> ()
    %cst_10 = arith.constant dense<0.000000e+00> : vector<2x8x8xf32>
    %39 = tpu.matmul %37, %38, %cst_10 {dimension_numbers = #tpu.dot_dimension_numbers<[2], [2], [1], [1], [0, 0, 0, 1, 1, 1], [0], [0]>} : vector<2x8x16xbf16>, vector<2x8x16xbf16>, vector<2x8x8xf32> -> vector<2x8x8xf32>
    "tpu.trace_stop"() : () -> ()
    %40 = vector.extract_strided_slice %34 {offsets = [0, 0, 16], sizes = [2, 8, 16], strides = [1, 1, 1]} : vector<2x8x128xbf16> to vector<2x8x16xbf16>
    %41 = vector.extract_strided_slice %34 {offsets = [0, 0, 80], sizes = [2, 8, 16], strides = [1, 1, 1]} : vector<2x8x128xbf16> to vector<2x8x16xbf16>
    "tpu.trace_start"() <{level = 10 : i32, message = "bqd,bkd->bqk"}> : () -> ()
    %cst_11 = arith.constant dense<0.000000e+00> : vector<2x8x8xf32>
    %42 = tpu.matmul %40, %41, %cst_11 {dimension_numbers = #tpu.dot_dimension_numbers<[2], [2], [1], [1], [0, 0, 0, 1, 1, 1], [0], [0]>} : vector<2x8x16xbf16>, vector<2x8x16xbf16>, vector<2x8x8xf32> -> vector<2x8x8xf32>
    "tpu.trace_stop"() : () -> ()
    %43 = vector.extract_strided_slice %34 {offsets = [0, 0, 32], sizes = [2, 8, 16], strides = [1, 1, 1]} : vector<2x8x128xbf16> to vector<2x8x16xbf16>
    %44 = vector.extract_strided_slice %34 {offsets = [0, 0, 96], sizes = [2, 8, 16], strides = [1, 1, 1]} : vector<2x8x128xbf16> to vector<2x8x16xbf16>
    "tpu.trace_start"() <{level = 10 : i32, message = "bqd,bkd->bqk"}> : () -> ()
    %cst_12 = arith.constant dense<0.000000e+00> : vector<2x8x8xf32>
    %45 = tpu.matmul %43, %44, %cst_12 {dimension_numbers = #tpu.dot_dimension_numbers<[2], [2], [1], [1], [0, 0, 0, 1, 1, 1], [0], [0]>} : vector<2x8x16xbf16>, vector<2x8x16xbf16>, vector<2x8x8xf32> -> vector<2x8x8xf32>
    "tpu.trace_stop"() : () -> ()
    %46 = vector.extract_strided_slice %34 {offsets = [0, 0, 48], sizes = [2, 8, 16], strides = [1, 1, 1]} : vector<2x8x128xbf16> to vector<2x8x16xbf16>
    %47 = vector.extract_strided_slice %34 {offsets = [0, 0, 112], sizes = [2, 8, 16], strides = [1, 1, 1]} : vector<2x8x128xbf16> to vector<2x8x16xbf16>
    "tpu.trace_start"() <{level = 10 : i32, message = "bqd,bkd->bqk"}> : () -> ()
    %cst_13 = arith.constant dense<0.000000e+00> : vector<2x8x8xf32>
    %48 = tpu.matmul %46, %47, %cst_13 {dimension_numbers = #tpu.dot_dimension_numbers<[2], [2], [1], [1], [0, 0, 0, 1, 1, 1], [0], [0]>} : vector<2x8x16xbf16>, vector<2x8x16xbf16>, vector<2x8x8xf32> -> vector<2x8x8xf32>
    "tpu.trace_stop"() : () -> ()
    %49 = vector.shape_cast %39 : vector<2x8x8xf32> to vector<1x2x8x8xf32>
    %50 = vector.shape_cast %42 : vector<2x8x8xf32> to vector<1x2x8x8xf32>
    %51 = vector.shape_cast %45 : vector<2x8x8xf32> to vector<1x2x8x8xf32>
    %52 = vector.shape_cast %48 : vector<2x8x8xf32> to vector<1x2x8x8xf32>
    %53 = tpu.concatenate %49, %50, %51, %52 in 0 : vector<1x2x8x8xf32>, vector<1x2x8x8xf32>, vector<1x2x8x8xf32>, vector<1x2x8x8xf32> -> vector<4x2x8x8xf32>
    %cst_14 = arith.constant 2.500000e-01 : f32
    %54 = vector.broadcast %cst_14 : f32 to vector<4x2x8x8xf32>
    %55 = arith.mulf %53, %54 : vector<4x2x8x8xf32>
    %cst_15 = arith.constant dense<0xFF800000> : vector<4x2x8xf32>
    %56 = vector.multi_reduction <maximumf>, %55, %cst_15 [3] : vector<4x2x8x8xf32> to vector<4x2x8xf32>
    %57 = vector.shape_cast %56 : vector<4x2x8xf32> to vector<4x2x8x1xf32>
    %58 = vector.broadcast %57 : vector<4x2x8x1xf32> to vector<4x2x8x8xf32>
    %59 = arith.subf %55, %58 : vector<4x2x8x8xf32>
    %60 = math.exp %59 : vector<4x2x8x8xf32>
    %cst_16 = arith.constant dense<0.000000e+00> : vector<4x2x8xf32>
    %61 = vector.multi_reduction <add>, %60, %cst_16 [3] : vector<4x2x8x8xf32> to vector<4x2x8xf32>
    %62 = vector.shape_cast %61 : vector<4x2x8xf32> to vector<4x2x8x1xf32>
    %63 = tpu.reciprocal %62 {approx = true} : vector<4x2x8x1xf32> -> vector<4x2x8x1xf32>
    %64 = vector.broadcast %63 : vector<4x2x8x1xf32> to vector<4x2x8x8xf32>
    %65 = arith.mulf %60, %64 : vector<4x2x8x8xf32>
    %66 = arith.truncf %65 : vector<4x2x8x8xf32> to vector<4x2x8x8xbf16>
    %67 = vector.extract_strided_slice %66 {offsets = [0, 0, 0, 0], sizes = [1, 2, 8, 8], strides = [1, 1, 1, 1]} : vector<4x2x8x8xbf16> to vector<1x2x8x8xbf16>
    %68 = vector.shape_cast %67 : vector<1x2x8x8xbf16> to vector<2x8x8xbf16>
    %69 = vector.extract_strided_slice %36 {offsets = [0, 0, 0], sizes = [2, 8, 16], strides = [1, 1, 1]} : vector<2x8x64xbf16> to vector<2x8x16xbf16>
    "tpu.trace_start"() <{level = 10 : i32, message = "bqk,bkd->bqd"}> : () -> ()
    %cst_17 = arith.constant dense<0.000000e+00> : vector<2x8x16xf32>
    %70 = tpu.matmul %68, %69, %cst_17 {dimension_numbers = #tpu.dot_dimension_numbers<[2], [1], [1], [2], [0, 0, 0, 1, 1, 2], [0], [0]>} : vector<2x8x8xbf16>, vector<2x8x16xbf16>, vector<2x8x16xf32> -> vector<2x8x16xf32>
    "tpu.trace_stop"() : () -> ()
    %71 = vector.extract_strided_slice %66 {offsets = [1, 0, 0, 0], sizes = [1, 2, 8, 8], strides = [1, 1, 1, 1]} : vector<4x2x8x8xbf16> to vector<1x2x8x8xbf16>
    %72 = vector.shape_cast %71 : vector<1x2x8x8xbf16> to vector<2x8x8xbf16>
    %73 = vector.extract_strided_slice %36 {offsets = [0, 0, 16], sizes = [2, 8, 16], strides = [1, 1, 1]} : vector<2x8x64xbf16> to vector<2x8x16xbf16>
    "tpu.trace_start"() <{level = 10 : i32, message = "bqk,bkd->bqd"}> : () -> ()
    %cst_18 = arith.constant dense<0.000000e+00> : vector<2x8x16xf32>
    %74 = tpu.matmul %72, %73, %cst_18 {dimension_numbers = #tpu.dot_dimension_numbers<[2], [1], [1], [2], [0, 0, 0, 1, 1, 2], [0], [0]>} : vector<2x8x8xbf16>, vector<2x8x16xbf16>, vector<2x8x16xf32> -> vector<2x8x16xf32>
    "tpu.trace_stop"() : () -> ()
    %75 = vector.extract_strided_slice %66 {offsets = [2, 0, 0, 0], sizes = [1, 2, 8, 8], strides = [1, 1, 1, 1]} : vector<4x2x8x8xbf16> to vector<1x2x8x8xbf16>
    %76 = vector.shape_cast %75 : vector<1x2x8x8xbf16> to vector<2x8x8xbf16>
    %77 = vector.extract_strided_slice %36 {offsets = [0, 0, 32], sizes = [2, 8, 16], strides = [1, 1, 1]} : vector<2x8x64xbf16> to vector<2x8x16xbf16>
    "tpu.trace_start"() <{level = 10 : i32, message = "bqk,bkd->bqd"}> : () -> ()
    %cst_19 = arith.constant dense<0.000000e+00> : vector<2x8x16xf32>
    %78 = tpu.matmul %76, %77, %cst_19 {dimension_numbers = #tpu.dot_dimension_numbers<[2], [1], [1], [2], [0, 0, 0, 1, 1, 2], [0], [0]>} : vector<2x8x8xbf16>, vector<2x8x16xbf16>, vector<2x8x16xf32> -> vector<2x8x16xf32>
    "tpu.trace_stop"() : () -> ()
    %79 = vector.extract_strided_slice %66 {offsets = [3, 0, 0, 0], sizes = [1, 2, 8, 8], strides = [1, 1, 1, 1]} : vector<4x2x8x8xbf16> to vector<1x2x8x8xbf16>
    %80 = vector.shape_cast %79 : vector<1x2x8x8xbf16> to vector<2x8x8xbf16>
    %81 = vector.extract_strided_slice %36 {offsets = [0, 0, 48], sizes = [2, 8, 16], strides = [1, 1, 1]} : vector<2x8x64xbf16> to vector<2x8x16xbf16>
    "tpu.trace_start"() <{level = 10 : i32, message = "bqk,bkd->bqd"}> : () -> ()
    %cst_20 = arith.constant dense<0.000000e+00> : vector<2x8x16xf32>
    %82 = tpu.matmul %80, %81, %cst_20 {dimension_numbers = #tpu.dot_dimension_numbers<[2], [1], [1], [2], [0, 0, 0, 1, 1, 2], [0], [0]>} : vector<2x8x8xbf16>, vector<2x8x16xbf16>, vector<2x8x16xf32> -> vector<2x8x16xf32>
    "tpu.trace_stop"() : () -> ()
    %83 = tpu.concatenate %70, %74, %78, %82 in 2 : vector<2x8x16xf32>, vector<2x8x16xf32>, vector<2x8x16xf32>, vector<2x8x16xf32> -> vector<2x8x64xf32>
    %84 = vector.shape_cast %83 : vector<2x8x64xf32> to vector<16x64xf32>
    %85 = arith.truncf %84 : vector<16x64xf32> to vector<16x64xbf16>
    %c0_21 = arith.constant 0 : index
    %c0_22 = arith.constant 0 : index
    %86 = vector.load %arg4[%c0_21, %c0_22] : memref<64x64xbf16, #tpu.memory_space<vmem>>, vector<64x64xbf16>
    %cst_23 = arith.constant dense<0.000000e+00> : vector<16x64xf32>
    %87 = tpu.matmul %85, %86, %cst_23 {dimension_numbers = #tpu.dot_dimension_numbers<[1], [0], [0], [1], [0, 0, 1, 1], [], []>} : vector<16x64xbf16>, vector<64x64xbf16>, vector<16x64xf32> -> vector<16x64xf32>
    %88 = arith.addf %0, %87 : vector<16x64xf32>
    %89 = arith.mulf %88, %88 : vector<16x64xf32>
    %cst_24 = arith.constant dense<0.000000e+00> : vector<16xf32>
    %90 = vector.multi_reduction <add>, %89, %cst_24 [1] : vector<16x64xf32> to vector<16xf32>
    %91 = vector.shape_cast %90 : vector<16xf32> to vector<16x1xf32>
    %cst_25 = arith.constant 6.400000e+01 : f32
    %92 = vector.broadcast %cst_25 : f32 to vector<16x1xf32>
    %93 = arith.divf %91, %92 : vector<16x1xf32>
    %cst_26 = arith.constant 9.99999974E-6 : f32
    %94 = vector.broadcast %cst_26 : f32 to vector<16x1xf32>
    %95 = arith.addf %93, %94 : vector<16x1xf32>
    %96 = math.rsqrt %95 : vector<16x1xf32>
    %97 = vector.broadcast %96 : vector<16x1xf32> to vector<16x64xf32>
    %98 = arith.mulf %88, %97 : vector<16x64xf32>
    %99 = vector.broadcast %4 : vector<1x64xf32> to vector<16x64xf32>
    %100 = arith.mulf %98, %99 : vector<16x64xf32>
    %101 = vector.broadcast %5 : vector<1x64xf32> to vector<16x64xf32>
    %102 = arith.addf %100, %101 : vector<16x64xf32>
    %103 = arith.truncf %102 : vector<16x64xf32> to vector<16x64xbf16>
    %c0_27 = arith.constant 0 : index
    %c0_28 = arith.constant 0 : index
    %104 = vector.load %arg5[%c0_27, %c0_28] : memref<64x512xbf16, #tpu.memory_space<vmem>>, vector<64x512xbf16>
    %cst_29 = arith.constant dense<0.000000e+00> : vector<16x512xf32>
    %105 = tpu.matmul %103, %104, %cst_29 {dimension_numbers = #tpu.dot_dimension_numbers<[1], [0], [0], [1], [0, 0, 1, 1], [], []>} : vector<16x64xbf16>, vector<64x512xbf16>, vector<16x512xf32> -> vector<16x512xf32>
    %c0_30 = arith.constant 0 : index
    %c0_31 = arith.constant 0 : index
    %106 = vector.load %arg6[%c0_30, %c0_31] : memref<1x512xf32, #tpu.memory_space<vmem>>, vector<1x512xf32>
    %107 = vector.broadcast %106 : vector<1x512xf32> to vector<16x512xf32>
    %108 = arith.addf %105, %107 : vector<16x512xf32>
    %109 = vector.extract_strided_slice %108 {offsets = [0, 0], sizes = [16, 256], strides = [1, 1]} : vector<16x512xf32> to vector<16x256xf32>
    %110 = vector.extract_strided_slice %108 {offsets = [0, 256], sizes = [16, 256], strides = [1, 1]} : vector<16x512xf32> to vector<16x256xf32>
    %111 = arith.negf %109 : vector<16x256xf32>
    %112 = math.exp %111 : vector<16x256xf32>
    %cst_32 = arith.constant 1.000000e+00 : f32
    %113 = vector.broadcast %cst_32 : f32 to vector<16x256xf32>
    %114 = arith.addf %113, %112 : vector<16x256xf32>
    %115 = arith.divf %113, %114 : vector<16x256xf32>
    %116 = arith.mulf %109, %115 : vector<16x256xf32>
    %117 = arith.mulf %116, %110 : vector<16x256xf32>
    %118 = arith.truncf %117 : vector<16x256xf32> to vector<16x256xbf16>
    %c0_33 = arith.constant 0 : index
    %c0_34 = arith.constant 0 : index
    %119 = vector.load %arg7[%c0_33, %c0_34] : memref<256x64xbf16, #tpu.memory_space<vmem>>, vector<256x64xbf16>
    %cst_35 = arith.constant dense<0.000000e+00> : vector<16x64xf32>
    %120 = tpu.matmul %118, %119, %cst_35 {dimension_numbers = #tpu.dot_dimension_numbers<[1], [0], [0], [1], [0, 0, 1, 1], [], []>} : vector<16x256xbf16>, vector<256x64xbf16>, vector<16x64xf32> -> vector<16x64xf32>
    %121 = vector.broadcast %6 : vector<1x64xf32> to vector<16x64xf32>
    %122 = arith.addf %120, %121 : vector<16x64xf32>
    %123 = arith.addf %88, %122 : vector<16x64xf32>
    %c0_36 = arith.constant 0 : index
    %c0_37 = arith.constant 0 : index
    %124 = vector.load %arg8[%c0_36, %c0_37] : memref<16x64xf32, #tpu.memory_space<vmem>>, vector<16x64xf32>
    tpu.vector_store %arg8[%c0_36, %c0_37], %123 {strides = array<i32>} : memref<16x64xf32, #tpu.memory_space<vmem>>, vector<16x64xf32>,
    return
  }
}

</mosaic_0001>

<llo_original>
// kernel: encoder_block_pallas.1
$region0: #{encoder_block_pallas.1}
  #allocation0 [shape = 'u32[]', space=smem, size = 0x4, offset = 0x4, fixed_abs, tag = 'smem constant byte address 0x4 - core index']
  #allocation1 [shape = 'u32[144,128]{1,0:T(1,128)}', space=vmem, size = 0x12000, scoped, tag = 'internal scratch']
  %s0 = inlined_call_operand.hbm [shape: f32[16,64], index: 0, kind: input, shape index: {}]
  %s1 = inlined_call_operand.vmem [shape: f32[16,256], index: 1, kind: input, shape index: {}]
  %s2 = inlined_call_operand.vmem [shape: f32[8,64], index: 2, kind: input, shape index: {}]
  %s3 = inlined_call_operand.hbm [shape: bf16[64,384], index: 3, kind: input, shape index: {}]
  %s4 = inlined_call_operand.vmem [shape: bf16[64,64], index: 4, kind: input, shape index: {}]
  %s5 = inlined_call_operand.vmem [shape: bf16[64,512], index: 5, kind: input, shape index: {}]
  %s6 = inlined_call_operand.hbm [shape: f32[1,512], index: 6, kind: input, shape index: {}]
  %s7 = inlined_call_operand.vmem [shape: bf16[256,64], index: 7, kind: input, shape index: {}]
  %s8 = inlined_call_operand.hbm [shape: f32[16,64], index: 8, kind: output, shape index: {}]
  %s9 = sld [smem:[#allocation0]]
  $region54: #{encoder_block_pallas.1} parent=0
    _
  %s11 = ssub.s32 1, %s9
  %s12 = scalar_select 0, %s11, %s9
  $region1: #{encoder_block_pallas.1} parent=0
    #allocation2 [shape = 'u8[8192]{0}', space=vmem, size = 0x2000, scoped, tag = 'input window, operand 0, single buffered']
    #allocation3 [shape = 's32[1]{0}', space=sflag, size = 0x4, scoped, tag = 'scoped memory for encoder_block_pallas.1']
    #allocation4 [shape = 's32[1]{0}', space=sflag, size = 0x4, scoped, tag = 'scoped memory for encoder_block_pallas.1']
    #allocation5 [shape = 'u8[49152]{0}', space=vmem, size = 0xc000, scoped, tag = 'input window, operand 3, single buffered']
    #allocation6 [shape = 's32[1]{0}', space=sflag, size = 0x4, scoped, tag = 'scoped memory for encoder_block_pallas.1']
    #allocation7 [shape = 'u8[2048]{0}', space=vmem, size = 0x800, scoped, tag = 'input window, operand 6, single buffered']
    #allocation8 [shape = 'u8[8192]{0}', space=vmem, size = 0x2000, scoped, tag = 'output window, operand 0, single buffered']
    %13 = vsyncpa [#allocation3], 0
    %14 = vsyncpa [#allocation6], 0
    %15 = vsyncpa [#allocation4], 0
    // Predicated region
    $region2: #{encoder_block_pallas.1} parent=1 // pred_check
      _
    $region3: #{encoder_block_pallas.1} parent=1 // pred_check_branch
      %17 = sbr.rel (0) target = $region5
    $region4: #{encoder_block_pallas.1} parent=1 // pred_region
      %s19 = ssub.s32 256, 256
      %20 = vsyncadd [#allocation3], %s19
      %s21 = sshll.u32 [#allocation2], 4
      %s22 = int_to_ptr.vmem [resolvable:$true] %s21
      %27 = dma.hbm_to_vmem [thread:$0]  %s0, 256, %s22, [#allocation3], 128, 128, 8
    $region5: #{encoder_block_pallas.1} parent=1 // pred_fallthru
      _
    // Predicated region
    $region6: #{encoder_block_pallas.1} parent=1 // pred_check
      _
    $region7: #{encoder_block_pallas.1} parent=1 // pred_check_branch
      %29 = sbr.rel (0) target = $region9
    $region8: #{encoder_block_pallas.1} parent=1 // pred_region
      _
    $region9: #{encoder_block_pallas.1} parent=1 // pred_fallthru
      _
    // Predicated region
    $region10: #{encoder_block_pallas.1} parent=1 // pred_check
      _
    $region11: #{encoder_block_pallas.1} parent=1 // pred_check_branch
      %31 = sbr.rel (0) target = $region13
    $region12: #{encoder_block_pallas.1} parent=1 // pred_region
      _
    $region13: #{encoder_block_pallas.1} parent=1 // pred_fallthru
      _
    // Predicated region
    $region14: #{encoder_block_pallas.1} parent=1 // pred_check
      _
    $region15: #{encoder_block_pallas.1} parent=1 // pred_check_branch
      %33 = sbr.rel (0) target = $region17
    $region16: #{encoder_block_pallas.1} parent=1 // pred_region
      %s35 = ssub.s32 1536, 1536
      %36 = vsyncadd [#allocation6], %s35
      %s37 = sshll.u32 [#allocation5], 4
      %s38 = int_to_ptr.vmem [resolvable:$true] %s37
      %43 = dma.hbm_to_vmem [thread:$0]  %s3, 1536, %s38, [#allocation6], 192, 192, 12
    $region17: #{encoder_block_pallas.1} parent=1 // pred_fallthru
      _
    // Predicated region
    $region18: #{encoder_block_pallas.1} parent=1 // pred_check
      _
    $region19: #{encoder_block_pallas.1} parent=1 // pred_check_branch
      %45 = sbr.rel (0) target = $region21
    $region20: #{encoder_block_pallas.1} parent=1 // pred_region
      _
    $region21: #{encoder_block_pallas.1} parent=1 // pred_fallthru
      _
    // Predicated region
    $region22: #{encoder_block_pallas.1} parent=1 // pred_check
      _
    $region23: #{encoder_block_pallas.1} parent=1 // pred_check_branch
      %47 = sbr.rel (0) target = $region25
    $region24: #{encoder_block_pallas.1} parent=1 // pred_region
      _
    $region25: #{encoder_block_pallas.1} parent=1 // pred_fallthru
      _
    // Predicated region
    $region26: #{encoder_block_pallas.1} parent=1 // pred_check
      _
    $region27: #{encoder_block_pallas.1} parent=1 // pred_check_branch
      %49 = sbr.rel (0) target = $region29
    $region28: #{encoder_block_pallas.1} parent=1 // pred_region
      %s51 = ssub.s32 64, 64
      %52 = vsyncadd [#allocation6], %s51
      %s54 = sshll.u32 [#allocation7], 4
      %s55 = int_to_ptr.vmem [resolvable:$true] %s54
      %57 = dma.hbm_to_vmem [thread:$0]  %s6, 64, %s55, [#allocation6]
    $region29: #{encoder_block_pallas.1} parent=1 // pred_fallthru
      _
    // Predicated region
    $region30: #{encoder_block_pallas.1} parent=1 // pred_check
      _
    $region31: #{encoder_block_pallas.1} parent=1 // pred_check_branch
      %59 = sbr.rel (0) target = $region33
    $region32: #{encoder_block_pallas.1} parent=1 // pred_region
      _
    $region33: #{encoder_block_pallas.1} parent=1 // pred_fallthru
      _
    // Predicated region
    $region34: #{encoder_block_pallas.1} parent=1 // pred_check
      _
    $region35: #{encoder_block_pallas.1} parent=1 // pred_check_branch
      %61 = sbr.rel (0) target = $region37
    $region36: #{encoder_block_pallas.1} parent=1 // pred_region
      %62 = dma.done [#allocation3], 256
    $region37: #{encoder_block_pallas.1} parent=1 // pred_fallthru
      _
    // Predicated region
    $region38: #{encoder_block_pallas.1} parent=1 // pred_check
      _
    $region39: #{encoder_block_pallas.1} parent=1 // pred_check_branch
      %64 = sbr.rel (0) target = $region41
    $region40: #{encoder_block_pallas.1} parent=1 // pred_region
      %65 = dma.done [#allocation6], 1536
    $region41: #{encoder_block_pallas.1} parent=1 // pred_fallthru
      _
    // Predicated region
    $region42: #{encoder_block_pallas.1} parent=1 // pred_check
      _
    $region43: #{encoder_block_pallas.1} parent=1 // pred_check_branch
      %67 = sbr.rel (0) target = $region45
    $region44: #{encoder_block_pallas.1} parent=1 // pred_region
      %68 = dma.done [#allocation6], 64
    $region45: #{encoder_block_pallas.1} parent=1 // pred_fallthru
      _
    %v70 = vld [vmem:[#allocation2] sm:$0xff]
    %v71 = vld [vmem:[#allocation2 + $0x8] sm:$0xff]
    %v72 = vld [vmem:[%s2] sm:$0xff]
    %v73 = vmul.f32 %v70, %v70
    %v74 = vmul.f32 %v71, %v71
    %vm75 = vcmask 523264
    %v76 = vsel %vm75, %v73, 0.0
    %77 = vadd.xlane.f32.xlu0 %v76
    %v78 = vpop.xlane.xlu0 %77
    %v79 = vsel %vm75, %v74, 0.0
    %80 = vadd.xlane.f32.xlu0 %v79
    %v81 = vpop.xlane.xlu0 %80
    %v82 = vrcp.pop 64.0
    %v83 = vmul.f32 %v78, %v82
    %v84 = vmul.f32 %v81, %v82
    %v85 = vadd.f32 %v83, 1e-05
    %v86 = vadd.f32 %v84, 1e-05
    %v87 = vrsqrt.pop %v85
    %v88 = vrsqrt.pop %v86
    %v89 = vmul.f32 %v70, %v87
    %v90 = vmul.f32 %v71, %v88
    %v91 = vlaneseq
    %v92 = vshrl.u32 %v91, 7
    %v93 = vsub.s32 0, %v92
    %v94 = vrot.slane %v72, %v93
    %v95 = vmul.f32 %v89, %v94
    %v96 = vmul.f32 %v90, %v94
    %v97 = vlaneseq
    %v98 = vshrl.u32 %v97, 7
    %v99 = vsub.s32 1, %v98
    %v100 = vrot.slane %v72, %v99
    %v101 = vadd.f32 %v95, %v100
    %v102 = vadd.f32 %v96, %v100
    %v103 = vpack.c.bf16 %v102, %v101
    %v104 = vld [vmem:[#allocation5] sm:$0xff]
    %v105 = vld [vmem:[#allocation5 + $0x8] sm:$0xf]
    %v106 = vld [vmem:[#allocation5 + $0xc] sm:$0xff]
    %v107 = vld [vmem:[#allocation5 + $0x14] sm:$0xf]
    %v108 = vld [vmem:[#allocation5 + $0x18] sm:$0xff]
    %v109 = vld [vmem:[#allocation5 + $0x20] sm:$0xf]
    %v110 = vld [vmem:[#allocation5 + $0x24] sm:$0xff]
    %v111 = vld [vmem:[#allocation5 + $0x2c] sm:$0xf]
    %v112 = vld [vmem:[#allocation5 + $0x30] sm:$0xff]
    %v113 = vld [vmem:[#allocation5 + $0x38] sm:$0xf]
    %v114 = vld [vmem:[#allocation5 + $0x3c] sm:$0xff]
    %v115 = vld [vmem:[#allocation5 + $0x44] sm:$0xf]
    %v116 = vld [vmem:[#allocation5 + $0x48] sm:$0xff]
    %v117 = vld [vmem:[#allocation5 + $0x50] sm:$0xf]
    %v118 = vld [vmem:[#allocation5 + $0x54] sm:$0xff]
    %v119 = vld [vmem:[#allocation5 + $0x5c] sm:$0xf]
    %v136 = vunpack.c.l.b16 %v104
    %v137 = vunpack.c.h.b16 %v104
    %v138 = vunpack.c.l.b16 %v105
    %v139 = vunpack.c.l.b16 %v106
    %v140 = vunpack.c.h.b16 %v106
    %v141 = vunpack.c.l.b16 %v107
    %v142 = vunpack.c.l.b16 %v108
    %v143 = vunpack.c.h.b16 %v108
    %v144 = vunpack.c.l.b16 %v109
    %v145 = vunpack.c.l.b16 %v110
    %v146 = vunpack.c.h.b16 %v110
    %v147 = vunpack.c.l.b16 %v111
    %v148 = vunpack.c.l.b16 %v112
    %v149 = vunpack.c.h.b16 %v112
    %v150 = vunpack.c.l.b16 %v113
    %v151 = vunpack.c.l.b16 %v114
    %v152 = vunpack.c.h.b16 %v114
    %v153 = vunpack.c.l.b16 %v115
    %v154 = vunpack.c.l.b16 %v116
    %v155 = vunpack.c.h.b16 %v116
    %v156 = vunpack.c.l.b16 %v117
    %v157 = vunpack.c.l.b16 %v118
    %v158 = vunpack.c.h.b16 %v118
    %v159 = vunpack.c.l.b16 %v119
    %v160 = vpack.c.b16 %v139, %v136
    %v161 = vpack.c.b16 %v140, %v137
    %v162 = vpack.c.b16 %v141, %v138
    %v163 = vpack.c.b16 %v145, %v142
    %v164 = vpack.c.b16 %v146, %v143
    %v165 = vpack.c.b16 %v147, %v144
    %v166 = vpack.c.b16 %v151, %v148
    %v167 = vpack.c.b16 %v152, %v149
    %v168 = vpack.c.b16 %v153, %v150
    %v169 = vpack.c.b16 %v157, %v154
    %v170 = vpack.c.b16 %v158, %v155
    %v171 = vpack.c.b16 %v159, %v156
    %v185 = vsel %vm75, %v103, 0
    %187 = vmatprep.subr.bf16.mxu0 0
    %188 = vmatpush1.bf16.msra.mxu0 0
    %189 = vmatprep.subr.bf16.mxu0 0
    %190 = vmatpush1.bf16.msra.mxu0 0
    %191 = vmatprep.subr.bf16.mxu0 0
    %192 = vmatpush1.bf16.msra.mxu0 0
    %193 = vmatprep.subr.bf16.mxu0 0
    %194 = vmatpush1.bf16.msra.mxu0 0
    %195 = vmatprep.subr.bf16.mxu0 %v170
    %196 = vmatpush1.bf16.msra.mxu0 %v169
    %197 = vmatprep.subr.bf16.mxu0 %v167
    %198 = vmatpush1.bf16.msra.mxu0 %v166
    %199 = vmatprep.subr.bf16.mxu0 %v164
    %200 = vmatpush1.bf16.msra.mxu0 %v163
    %201 = vmatprep.subr.bf16.mxu0 %v161
    %202 = vmatpush1.bf16.msra.mxu0 %v160
    %203 = vmatprep.subr.bf16.mxu0 0
    %204 = vmatpush2.bf16.msra.mxu0 0
    %205 = vmatprep.subr.bf16.mxu0 0
    %206 = vmatpush2.bf16.msra.mxu0 0
    %207 = vmatprep.subr.bf16.mxu0 0
    %208 = vmatpush2.bf16.msra.mxu0 0
    %209 = vmatprep.subr.bf16.mxu0 0
    %210 = vmatpush2.bf16.msra.mxu0 0
    %211 = vmatprep.subr.bf16.mxu0 0
    %212 = vmatpush2.bf16.msra.mxu0 0
    %213 = vmatprep.subr.bf16.mxu0 0
    %214 = vmatpush2.bf16.msra.mxu0 0
    %215 = vmatprep.subr.bf16.mxu0 0
    %216 = vmatpush2.bf16.msra.mxu0 0
    %217 = vmatprep.subr.bf16.mxu0 0
    %218 = vmatpush2.bf16.msra.mxu0 0
    %219 = vmatprep.mubr.bf16.mxu0 0
    %220 = vmatmul.mubr.bf16.gmra.mxu0 %v185
    %v221 = vpop.f32.mrf.mxu0
    %v222 = vadd.f32 0.0, %v221
    %v223 = vpop.f32.mrf.mxu0
    %v224 = vadd.f32 0.0, %v223
    %v225 = vpop.f32.mrf.mxu0
    %v226 = vadd.f32 0.0, %v225
    %v227 = vpop.f32.mrf.mxu0
    %v228 = vadd.f32 0.0, %v227
    %229 = vdwg.mxu0
    %230 = vmatprep.subr.bf16.mxu0 0
    %231 = vmatpush1.bf16.msra.mxu0 0
    %232 = vmatprep.subr.bf16.mxu0 0
    %233 = vmatpush1.bf16.msra.mxu0 0
    %234 = vmatprep.subr.bf16.mxu0 0
    %235 = vmatpush1.bf16.msra.mxu0 0
    %236 = vmatprep.subr.bf16.mxu0 0
    %237 = vmatpush1.bf16.msra.mxu0 0
    %238 = vmatprep.subr.bf16.mxu0 0
    %239 = vmatpush1.bf16.msra.mxu0 %v171
    %240 = vmatprep.subr.bf16.mxu0 0
    %241 = vmatpush1.bf16.msra.mxu0 %v168
    %242 = vmatprep.subr.bf16.mxu0 0
    %243 = vmatpush1.bf16.msra.mxu0 %v165
    %244 = vmatprep.subr.bf16.mxu0 0
    %245 = vmatpush1.bf16.msra.mxu0 %v162
    %246 = vmatprep.subr.bf16.mxu0 0
    %247 = vmatpush2.bf16.msra.mxu0 0
    %248 = vmatprep.subr.bf16.mxu0 0
    %249 = vmatpush2.bf16.msra.mxu0 0
    %250 = vmatprep.subr.bf16.mxu0 0
    %251 = vmatpush2.bf16.msra.mxu0 0
    %252 = vmatprep.subr.bf16.mxu0 0
    %253 = vmatpush2.bf16.msra.mxu0 0
    %254 = vmatprep.subr.bf16.mxu0 0
    %255 = vmatpush2.bf16.msra.mxu0 0
    %256 = vmatprep.subr.bf16.mxu0 0
    %257 = vmatpush2.bf16.msra.mxu0 0
    %258 = vmatprep.subr.bf16.mxu0 0
    %259 = vmatpush2.bf16.msra.mxu0 0
    %260 = vmatprep.subr.bf16.mxu0 0
    %261 = vmatpush2.bf16.msra.mxu0 0
    %262 = vmatprep.mubr.bf16.mxu0 0
    %263 = vmatmul.mubr.bf16.gmra.mxu0 %v185
    %v264 = vpop.f32.mrf.mxu0
    %v265 = vadd.f32 0.0, %v264
    %v266 = vpop.f32.mrf.mxu0
    %v267 = vpop.f32.mrf.mxu0
    %v268 = vadd.f32 0.0, %v267
    %v269 = vpop.f32.mrf.mxu0
    %270 = vdwg.mxu0
    %v271 = vld [vmem:[%s1] sm:$0xff]
    %v272 = vld [vmem:[%s1 + $0x8] sm:$0xff]
    %v273 = vld [vmem:[%s1 + $0x10] sm:$0xff]
    %v274 = vld [vmem:[%s1 + $0x18] sm:$0xff]
    %v275 = vmul.f32 %v222, %v271
    %v276 = vmul.f32 %v226, %v273
    %v277 = vmul.f32 %v224, %v272
    %v278 = vmul.f32 %v228, %v274
    %v279 = vadd.f32 %v275, %v277
    %v280 = vadd.f32 %v276, %v278
    %v281 = vpack.c.bf16 %v279, %v279
    %v282 = vpack.c.bf16 %v280, %v280
    %v283 = vpack.c.bf16 %v265, %v265
    %v284 = vpack.c.bf16 %v268, %v268
    %286 = vrot.lane.b32.xlu0 %v281, 64
    %v287 = vpop.permute.xlu0 %286
    %vm288 = vcmask 130048
    %v290 = vsel %vm288, %v281, 0
    %v293 = vsel %vm288, %v287, 0
    %295 = vmatprep.subr.bf16.mxu0 0
    %296 = vmatpush1.bf16.xpose.msra.mxu0 0
    %297 = vmatprep.subr.bf16.mxu0 0
    %298 = vmatpush1.bf16.xpose.msra.mxu0 0
    %299 = vmatprep.subr.bf16.mxu0 0
    %300 = vmatpush1.bf16.xpose.msra.mxu0 0
    %301 = vmatprep.subr.bf16.mxu0 0
    %302 = vmatpush1.bf16.xpose.msra.mxu0 0
    %303 = vmatprep.subr.bf16.mxu0 0
    %304 = vmatpush1.bf16.xpose.msra.mxu0 0
    %305 = vmatprep.subr.bf16.mxu0 0
    %306 = vmatpush1.bf16.xpose.msra.mxu0 0
    %307 = vmatprep.subr.bf16.mxu0 0
    %308 = vmatpush1.bf16.xpose.msra.mxu0 0
    %309 = vmatprep.subr.bf16.mxu0 0
    %310 = vmatpush1.bf16.xpose.msra.mxu0 %v293
    %311 = vmatprep.subr.bf16.mxu0 0
    %312 = vmatpush2.bf16.xpose.msra.mxu0 0
    %313 = vmatprep.subr.bf16.mxu0 0
    %314 = vmatpush2.bf16.xpose.msra.mxu0 0
    %315 = vmatprep.subr.bf16.mxu0 0
    %316 = vmatpush2.bf16.xpose.msra.mxu0 0
    %317 = vmatprep.subr.bf16.mxu0 0
    %318 = vmatpush2.bf16.xpose.msra.mxu0 0
    %319 = vmatprep.subr.bf16.mxu0 0
    %320 = vmatpush2.bf16.xpose.msra.mxu0 0
    %321 = vmatprep.subr.bf16.mxu0 0
    %322 = vmatpush2.bf16.xpose.msra.mxu0 0
    %323 = vmatprep.subr.bf16.mxu0 0
    %324 = vmatpush2.bf16.xpose.msra.mxu0 0
    %325 = vmatprep.subr.bf16.mxu0 0
    %326 = vmatpush2.bf16.xpose.msra.mxu0 0
    %327 = vmatprep.mubr.bf16.mxu0 0
    %328 = vmatmul.mubr.bf16.gmra.mxu0 %v290
    %v329 = vpop.f32.mrf.mxu0
    %v330 = vadd.f32 0.0, %v329
    %v331 = vpop.f32.mrf.mxu0
    %v332 = vpop.f32.mrf.mxu0
    %v333 = vpop.f32.mrf.mxu0
    %334 = vdwg.mxu0
    %336 = vrot.lane.b32.xlu0 %v282, 64
    %v337 = vpop.permute.xlu0 %336
    %v339 = vsel %vm288, %v282, 0
    %v342 = vsel %vm288, %v337, 0
    %344 = vmatprep.subr.bf16.mxu0 0
    %345 = vmatpush1.bf16.xpose.msra.mxu0 0
    %346 = vmatprep.subr.bf16.mxu0 0
    %347 = vmatpush1.bf16.xpose.msra.mxu0 0
    %348 = vmatprep.subr.bf16.mxu0 0
    %349 = vmatpush1.bf16.xpose.msra.mxu0 0
    %350 = vmatprep.subr.bf16.mxu0 0
    %351 = vmatpush1.bf16.xpose.msra.mxu0 0
    %352 = vmatprep.subr.bf16.mxu0 0
    %353 = vmatpush1.bf16.xpose.msra.mxu0 0
    %354 = vmatprep.subr.bf16.mxu0 0
    %355 = vmatpush1.bf16.xpose.msra.mxu0 0
    %356 = vmatprep.subr.bf16.mxu0 0
    %357 = vmatpush1.bf16.xpose.msra.mxu0 0
    %358 = vmatprep.subr.bf16.mxu0 0
    %359 = vmatpush1.bf16.xpose.msra.mxu0 %v342
    %360 = vmatprep.subr.bf16.mxu0 0
    %361 = vmatpush2.bf16.xpose.msra.mxu0 0
    %362 = vmatprep.subr.bf16.mxu0 0
    %363 = vmatpush2.bf16.xpose.msra.mxu0 0
    %364 = vmatprep.subr.bf16.mxu0 0
    %365 = vmatpush2.bf16.xpose.msra.mxu0 0
    %366 = vmatprep.subr.bf16.mxu0 0
    %367 = vmatpush2.bf16.xpose.msra.mxu0 0
    %368 = vmatprep.subr.bf16.mxu0 0
    %369 = vmatpush2.bf16.xpose.msra.mxu0 0
    %370 = vmatprep.subr.bf16.mxu0 0
    %371 = vmatpush2.bf16.xpose.msra.mxu0 0
    %372 = vmatprep.subr.bf16.mxu0 0
    %373 = vmatpush2.bf16.xpose.msra.mxu0 0
    %374 = vmatprep.subr.bf16.mxu0 0
    %375 = vmatpush2.bf16.xpose.msra.mxu0 0
    %376 = vmatprep.mubr.bf16.mxu0 0
    %377 = vmatmul.mubr.bf16.gmra.mxu0 %v339
    %v378 = vpop.f32.mrf.mxu0
    %v379 = vadd.f32 0.0, %v378
    %v380 = vpop.f32.mrf.mxu0
    %v381 = vpop.f32.mrf.mxu0
    %v382 = vpop.f32.mrf.mxu0
    %383 = vdwg.mxu0
    %384 = vrot.lane.b32.xlu0 %v281, 112
    %v385 = vpop.permute.xlu0 %384
    %386 = vrot.lane.b32.xlu0 %v281, 48
    %v387 = vpop.permute.xlu0 %386
    %v389 = vsel %vm288, %v385, 0
    %v392 = vsel %vm288, %v387, 0
    %394 = vmatprep.subr.bf16.mxu0 0
    %395 = vmatpush1.bf16.xpose.msra.mxu0 0
    %396 = vmatprep.subr.bf16.mxu0 0
    %397 = vmatpush1.bf16.xpose.msra.mxu0 0
    %398 = vmatprep.subr.bf16.mxu0 0
    %399 = vmatpush1.bf16.xpose.msra.mxu0 0
    %400 = vmatprep.subr.bf16.mxu0 0
    %401 = vmatpush1.bf16.xpose.msra.mxu0 0
    %402 = vmatprep.subr.bf16.mxu0 0
    %403 = vmatpush1.bf16.xpose.msra.mxu0 0
    %404 = vmatprep.subr.bf16.mxu0 0
    %405 = vmatpush1.bf16.xpose.msra.mxu0 0
    %406 = vmatprep.subr.bf16.mxu0 0
    %407 = vmatpush1.bf16.xpose.msra.mxu0 0
    %408 = vmatprep.subr.bf16.mxu0 0
    %409 = vmatpush1.bf16.xpose.msra.mxu0 %v392
    %410 = vmatprep.subr.bf16.mxu0 0
    %411 = vmatpush2.bf16.xpose.msra.mxu0 0
    %412 = vmatprep.subr.bf16.mxu0 0
    %413 = vmatpush2.bf16.xpose.msra.mxu0 0
    %414 = vmatprep.subr.bf16.mxu0 0
    %415 = vmatpush2.bf16.xpose.msra.mxu0 0
    %416 = vmatprep.subr.bf16.mxu0 0
    %417 = vmatpush2.bf16.xpose.msra.mxu0 0
    %418 = vmatprep.subr.bf16.mxu0 0
    %419 = vmatpush2.bf16.xpose.msra.mxu0 0
    %420 = vmatprep.subr.bf16.mxu0 0
    %421 = vmatpush2.bf16.xpose.msra.mxu0 0
    %422 = vmatprep.subr.bf16.mxu0 0
    %423 = vmatpush2.bf16.xpose.msra.mxu0 0
    %424 = vmatprep.subr.bf16.mxu0 0
    %425 = vmatpush2.bf16.xpose.msra.mxu0 0
    %426 = vmatprep.mubr.bf16.mxu0 0
    %427 = vmatmul.mubr.bf16.gmra.mxu0 %v389
    %v428 = vpop.f32.mrf.mxu0
    %v429 = vadd.f32 0.0, %v428
    %v430 = vpop.f32.mrf.mxu0
    %v431 = vpop.f32.mrf.mxu0
    %v432 = vpop.f32.mrf.mxu0
    %433 = vdwg.mxu0
    %434 = vrot.lane.b32.xlu0 %v282, 112
    %v435 = vpop.permute.xlu0 %434
    %436 = vrot.lane.b32.xlu0 %v282, 48
    %v437 = vpop.permute.xlu0 %436
    %v439 = vsel %vm288, %v435, 0
    %v442 = vsel %vm288, %v437, 0
    %444 = vmatprep.subr.bf16.mxu0 0
    %445 = vmatpush1.bf16.xpose.msra.mxu0 0
    %446 = vmatprep.subr.bf16.mxu0 0
    %447 = vmatpush1.bf16.xpose.msra.mxu0 0
    %448 = vmatprep.subr.bf16.mxu0 0
    %449 = vmatpush1.bf16.xpose.msra.mxu0 0
    %450 = vmatprep.subr.bf16.mxu0 0
    %451 = vmatpush1.bf16.xpose.msra.mxu0 0
    %452 = vmatprep.subr.bf16.mxu0 0
    %453 = vmatpush1.bf16.xpose.msra.mxu0 0
    %454 = vmatprep.subr.bf16.mxu0 0
    %455 = vmatpush1.bf16.xpose.msra.mxu0 0
    %456 = vmatprep.subr.bf16.mxu0 0
    %457 = vmatpush1.bf16.xpose.msra.mxu0 0
    %458 = vmatprep.subr.bf16.mxu0 0
    %459 = vmatpush1.bf16.xpose.msra.mxu0 %v442
    %460 = vmatprep.subr.bf16.mxu0 0
    %461 = vmatpush2.bf16.xpose.msra.mxu0 0
    %462 = vmatprep.subr.bf16.mxu0 0
    %463 = vmatpush2.bf16.xpose.msra.mxu0 0
    %464 = vmatprep.subr.bf16.mxu0 0
    %465 = vmatpush2.bf16.xpose.msra.mxu0 0
    %466 = vmatprep.subr.bf16.mxu0 0
    %467 = vmatpush2.bf16.xpose.msra.mxu0 0
    %468 = vmatprep.subr.bf16.mxu0 0
    %469 = vmatpush2.bf16.xpose.msra.mxu0 0
    %470 = vmatprep.subr.bf16.mxu0 0
    %471 = vmatpush2.bf16.xpose.msra.mxu0 0
    %472 = vmatprep.subr.bf16.mxu0 0
    %473 = vmatpush2.bf16.xpose.msra.mxu0 0
    %474 = vmatprep.subr.bf16.mxu0 0
    %475 = vmatpush2.bf16.xpose.msra.mxu0 0
    %476 = vmatprep.mubr.bf16.mxu0 0
    %477 = vmatmul.mubr.bf16.gmra.mxu0 %v439
    %v478 = vpop.f32.mrf.mxu0
    %v479 = vadd.f32 0.0, %v478
    %v480 = vpop.f32.mrf.mxu0
    %v481 = vpop.f32.mrf.mxu0
    %v482 = vpop.f32.mrf.mxu0
    %483 = vdwg.mxu0
    %484 = vrot.lane.b32.xlu0 %v281, 96
    %v485 = vpop.permute.xlu0 %484
    %486 = vrot.lane.b32.xlu0 %v281, 32
    %v487 = vpop.permute.xlu0 %486
    %v489 = vsel %vm288, %v485, 0
    %v492 = vsel %vm288, %v487, 0
    %494 = vmatprep.subr.bf16.mxu0 0
    %495 = vmatpush1.bf16.xpose.msra.mxu0 0
    %496 = vmatprep.subr.bf16.mxu0 0
    %497 = vmatpush1.bf16.xpose.msra.mxu0 0
    %498 = vmatprep.subr.bf16.mxu0 0
    %499 = vmatpush1.bf16.xpose.msra.mxu0 0
    %500 = vmatprep.subr.bf16.mxu0 0
    %501 = vmatpush1.bf16.xpose.msra.mxu0 0
    %502 = vmatprep.subr.bf16.mxu0 0
    %503 = vmatpush1.bf16.xpose.msra.mxu0 0
    %504 = vmatprep.subr.bf16.mxu0 0
    %505 = vmatpush1.bf16.xpose.msra.mxu0 0
    %506 = vmatprep.subr.bf16.mxu0 0
    %507 = vmatpush1.bf16.xpose.msra.mxu0 0
    %508 = vmatprep.subr.bf16.mxu0 0
    %509 = vmatpush1.bf16.xpose.msra.mxu0 %v492
    %510 = vmatprep.subr.bf16.mxu0 0
    %511 = vmatpush2.bf16.xpose.msra.mxu0 0
    %512 = vmatprep.subr.bf16.mxu0 0
    %513 = vmatpush2.bf16.xpose.msra.mxu0 0
    %514 = vmatprep.subr.bf16.mxu0 0
    %515 = vmatpush2.bf16.xpose.msra.mxu0 0
    %516 = vmatprep.subr.bf16.mxu0 0
    %517 = vmatpush2.bf16.xpose.msra.mxu0 0
    %518 = vmatprep.subr.bf16.mxu0 0
    %519 = vmatpush2.bf16.xpose.msra.mxu0 0
    %520 = vmatprep.subr.bf16.mxu0 0
    %521 = vmatpush2.bf16.xpose.msra.mxu0 0
    %522 = vmatprep.subr.bf16.mxu0 0
    %523 = vmatpush2.bf16.xpose.msra.mxu0 0
    %524 = vmatprep.subr.bf16.mxu0 0
    %525 = vmatpush2.bf16.xpose.msra.mxu0 0
    %526 = vmatprep.mubr.bf16.mxu0 0
    %527 = vmatmul.mubr.bf16.gmra.mxu0 %v489
    %v528 = vpop.f32.mrf.mxu0
    %v529 = vadd.f32 0.0, %v528
    %v530 = vpop.f32.mrf.mxu0
    %v531 = vpop.f32.mrf.mxu0
    %v532 = vpop.f32.mrf.mxu0
    %533 = vdwg.mxu0
    %534 = vrot.lane.b32.xlu0 %v282, 96
    %v535 = vpop.permute.xlu0 %534
    %536 = vrot.lane.b32.xlu0 %v282, 32
    %v537 = vpop.permute.xlu0 %536
    %v539 = vsel %vm288, %v535, 0
    %v542 = vsel %vm288, %v537, 0
    %544 = vmatprep.subr.bf16.mxu0 0
    %545 = vmatpush1.bf16.xpose.msra.mxu0 0
    %546 = vmatprep.subr.bf16.mxu0 0
    %547 = vmatpush1.bf16.xpose.msra.mxu0 0
    %548 = vmatprep.subr.bf16.mxu0 0
    %549 = vmatpush1.bf16.xpose.msra.mxu0 0
    %550 = vmatprep.subr.bf16.mxu0 0
    %551 = vmatpush1.bf16.xpose.msra.mxu0 0
    %552 = vmatprep.subr.bf16.mxu0 0
    %553 = vmatpush1.bf16.xpose.msra.mxu0 0
    %554 = vmatprep.subr.bf16.mxu0 0
    %555 = vmatpush1.bf16.xpose.msra.mxu0 0
    %556 = vmatprep.subr.bf16.mxu0 0
    %557 = vmatpush1.bf16.xpose.msra.mxu0 0
    %558 = vmatprep.subr.bf16.mxu0 0
    %559 = vmatpush1.bf16.xpose.msra.mxu0 %v542
    %560 = vmatprep.subr.bf16.mxu0 0
    %561 = vmatpush2.bf16.xpose.msra.mxu0 0
    %562 = vmatprep.subr.bf16.mxu0 0
    %563 = vmatpush2.bf16.xpose.msra.mxu0 0
    %564 = vmatprep.subr.bf16.mxu0 0
    %565 = vmatpush2.bf16.xpose.msra.mxu0 0
    %566 = vmatprep.subr.bf16.mxu0 0
    %567 = vmatpush2.bf16.xpose.msra.mxu0 0
    %568 = vmatprep.subr.bf16.mxu0 0
    %569 = vmatpush2.bf16.xpose.msra.mxu0 0
    %570 = vmatprep.subr.bf16.mxu0 0
    %571 = vmatpush2.bf16.xpose.msra.mxu0 0
    %572 = vmatprep.subr.bf16.mxu0 0
    %573 = vmatpush2.bf16.xpose.msra.mxu0 0
    %574 = vmatprep.subr.bf16.mxu0 0
    %575 = vmatpush2.bf16.xpose.msra.mxu0 0
    %576 = vmatprep.mubr.bf16.mxu0 0
    %577 = vmatmul.mubr.bf16.gmra.mxu0 %v539
    %v578 = vpop.f32.mrf.mxu0
    %v579 = vadd.f32 0.0, %v578
    %v580 = vpop.f32.mrf.mxu0
    %v581 = vpop.f32.mrf.mxu0
    %v582 = vpop.f32.mrf.mxu0
    %583 = vdwg.mxu0
    %584 = vrot.lane.b32.xlu0 %v281, 80
    %v585 = vpop.permute.xlu0 %584
    %586 = vrot.lane.b32.xlu0 %v281, 16
    %v587 = vpop.permute.xlu0 %586
    %v589 = vsel %vm288, %v585, 0
    %v592 = vsel %vm288, %v587, 0
    %594 = vmatprep.subr.bf16.mxu0 0
    %595 = vmatpush1.bf16.xpose.msra.mxu0 0
    %596 = vmatprep.subr.bf16.mxu0 0
    %597 = vmatpush1.bf16.xpose.msra.mxu0 0
    %598 = vmatprep.subr.bf16.mxu0 0
    %599 = vmatpush1.bf16.xpose.msra.mxu0 0
    %600 = vmatprep.subr.bf16.mxu0 0
    %601 = vmatpush1.bf16.xpose.msra.mxu0 0
    %602 = vmatprep.subr.bf16.mxu0 0
    %603 = vmatpush1.bf16.xpose.msra.mxu0 0
    %604 = vmatprep.subr.bf16.mxu0 0
    %605 = vmatpush1.bf16.xpose.msra.mxu0 0
    %606 = vmatprep.subr.bf16.mxu0 0
    %607 = vmatpush1.bf16.xpose.msra.mxu0 0
    %608 = vmatprep.subr.bf16.mxu0 0
    %609 = vmatpush1.bf16.xpose.msra.mxu0 %v592
    %610 = vmatprep.subr.bf16.mxu0 0
    %611 = vmatpush2.bf16.xpose.msra.mxu0 0
    %612 = vmatprep.subr.bf16.mxu0 0
    %613 = vmatpush2.bf16.xpose.msra.mxu0 0
    %614 = vmatprep.subr.bf16.mxu0 0
    %615 = vmatpush2.bf16.xpose.msra.mxu0 0
    %616 = vmatprep.subr.bf16.mxu0 0
    %617 = vmatpush2.bf16.xpose.msra.mxu0 0
    %618 = vmatprep.subr.bf16.mxu0 0
    %619 = vmatpush2.bf16.xpose.msra.mxu0 0
    %620 = vmatprep.subr.bf16.mxu0 0
    %621 = vmatpush2.bf16.xpose.msra.mxu0 0
    %622 = vmatprep.subr.bf16.mxu0 0
    %623 = vmatpush2.bf16.xpose.msra.mxu0 0
    %624 = vmatprep.subr.bf16.mxu0 0
    %625 = vmatpush2.bf16.xpose.msra.mxu0 0
    %626 = vmatprep.mubr.bf16.mxu0 0
    %627 = vmatmul.mubr.bf16.gmra.mxu0 %v589
    %v628 = vpop.f32.mrf.mxu0
    %v629 = vadd.f32 0.0, %v628
    %v630 = vpop.f32.mrf.mxu0
    %v631 = vpop.f32.mrf.mxu0
    %v632 = vpop.f32.mrf.mxu0
    %633 = vdwg.mxu0
    %634 = vrot.lane.b32.xlu0 %v282, 80
    %v635 = vpop.permute.xlu0 %634
    %636 = vrot.lane.b32.xlu0 %v282, 16
    %v637 = vpop.permute.xlu0 %636
    %v639 = vsel %vm288, %v635, 0
    %v642 = vsel %vm288, %v637, 0
    %644 = vmatprep.subr.bf16.mxu0 0
    %645 = vmatpush1.bf16.xpose.msra.mxu0 0
    %646 = vmatprep.subr.bf16.mxu0 0
    %647 = vmatpush1.bf16.xpose.msra.mxu0 0
    %648 = vmatprep.subr.bf16.mxu0 0
    %649 = vmatpush1.bf16.xpose.msra.mxu0 0
    %650 = vmatprep.subr.bf16.mxu0 0
    %651 = vmatpush1.bf16.xpose.msra.mxu0 0
    %652 = vmatprep.subr.bf16.mxu0 0
    %653 = vmatpush1.bf16.xpose.msra.mxu0 0
    %654 = vmatprep.subr.bf16.mxu0 0
    %655 = vmatpush1.bf16.xpose.msra.mxu0 0
    %656 = vmatprep.subr.bf16.mxu0 0
    %657 = vmatpush1.bf16.xpose.msra.mxu0 0
    %658 = vmatprep.subr.bf16.mxu0 0
    %659 = vmatpush1.bf16.xpose.msra.mxu0 %v642
    %660 = vmatprep.subr.bf16.mxu0 0
    %661 = vmatpush2.bf16.xpose.msra.mxu0 0
    %662 = vmatprep.subr.bf16.mxu0 0
    %663 = vmatpush2.bf16.xpose.msra.mxu0 0
    %664 = vmatprep.subr.bf16.mxu0 0
    %665 = vmatpush2.bf16.xpose.msra.mxu0 0
    %666 = vmatprep.subr.bf16.mxu0 0
    %667 = vmatpush2.bf16.xpose.msra.mxu0 0
    %668 = vmatprep.subr.bf16.mxu0 0
    %669 = vmatpush2.bf16.xpose.msra.mxu0 0
    %670 = vmatprep.subr.bf16.mxu0 0
    %671 = vmatpush2.bf16.xpose.msra.mxu0 0
    %672 = vmatprep.subr.bf16.mxu0 0
    %673 = vmatpush2.bf16.xpose.msra.mxu0 0
    %674 = vmatprep.subr.bf16.mxu0 0
    %675 = vmatpush2.bf16.xpose.msra.mxu0 0
    %676 = vmatprep.mubr.bf16.mxu0 0
    %677 = vmatmul.mubr.bf16.gmra.mxu0 %v639
    %v678 = vpop.f32.mrf.mxu0
    %v679 = vadd.f32 0.0, %v678
    %v680 = vpop.f32.mrf.mxu0
    %v681 = vpop.f32.mrf.mxu0
    %v682 = vpop.f32.mrf.mxu0
    %683 = vdwg.mxu0
    %v684 = vmul.f32 %v330, 0.25
    %v685 = vmul.f32 %v379, 0.25
    %v686 = vmul.f32 %v429, 0.25
    %v687 = vmul.f32 %v479, 0.25
    %v688 = vmul.f32 %v529, 0.25
    %v689 = vmul.f32 %v579, 0.25
    %v690 = vmul.f32 %v629, 0.25
    %v691 = vmul.f32 %v679, 0.25
    %vm692 = vcmask 64512
    %v693 = vsel %vm692, %v684, -inf
    %694 = vmax.xlane.f32.xlu0 %v693
    %v695 = vpop.xlane.xlu0 %694
    %v696 = vsel %vm692, %v685, -inf
    %697 = vmax.xlane.f32.xlu0 %v696
    %v698 = vpop.xlane.xlu0 %697
    %v699 = vsel %vm692, %v686, -inf
    %700 = vmax.xlane.f32.xlu0 %v699
    %v701 = vpop.xlane.xlu0 %700
    %v702 = vsel %vm692, %v687, -inf
    %703 = vmax.xlane.f32.xlu0 %v702
    %v704 = vpop.xlane.xlu0 %703
    %v705 = vsel %vm692, %v688, -inf
    %706 = vmax.xlane.f32.xlu0 %v705
    %v707 = vpop.xlane.xlu0 %706
    %v708 = vsel %vm692, %v689, -inf
    %709 = vmax.xlane.f32.xlu0 %v708
    %v710 = vpop.xlane.xlu0 %709
    %v711 = vsel %vm692, %v690, -inf
    %712 = vmax.xlane.f32.xlu0 %v711
    %v713 = vpop.xlane.xlu0 %712
    %v714 = vsel %vm692, %v691, -inf
    %715 = vmax.xlane.f32.xlu0 %v714
    %v716 = vpop.xlane.xlu0 %715
    %v717 = vsub.f32 %v684, %v695
    %v718 = vsub.f32 %v685, %v698
    %v719 = vsub.f32 %v686, %v701
    %v720 = vsub.f32 %v687, %v704
    %v721 = vsub.f32 %v688, %v707
    %v722 = vsub.f32 %v689, %v710
    %v723 = vsub.f32 %v690, %v713
    %v724 = vsub.f32 %v691, %v716
    %v725 = vmul.f32 %v717, 1.442695
    %v726 = vpow.pop %v725
    %v727 = vmul.f32 %v718, 1.442695
    %v728 = vpow.pop %v727
    %v729 = vmul.f32 %v719, 1.442695
    %v730 = vpow.pop %v729
    %v731 = vmul.f32 %v720, 1.442695
    %v732 = vpow.pop %v731
    %v733 = vmul.f32 %v721, 1.442695
    %v734 = vpow.pop %v733
    %v735 = vmul.f32 %v722, 1.442695
    %v736 = vpow.pop %v735
    %v737 = vmul.f32 %v723, 1.442695
    %v738 = vpow.pop %v737
    %v739 = vmul.f32 %v724, 1.442695
    %v740 = vpow.pop %v739
    %v741 = vsel %vm692, %v726, 0.0
    %742 = vadd.xlane.f32.xlu0 %v741
    %v743 = vpop.xlane.xlu0 %742
    %v744 = vsel %vm692, %v728, 0.0
    %745 = vadd.xlane.f32.xlu0 %v744
    %v746 = vpop.xlane.xlu0 %745
    %v747 = vsel %vm692, %v730, 0.0
    %748 = vadd.xlane.f32.xlu0 %v747
    %v749 = vpop.xlane.xlu0 %748
    %v750 = vsel %vm692, %v732, 0.0
    %751 = vadd.xlane.f32.xlu0 %v750
    %v752 = vpop.xlane.xlu0 %751
    %v753 = vsel %vm692, %v734, 0.0
    %754 = vadd.xlane.f32.xlu0 %v753
    %v755 = vpop.xlane.xlu0 %754
    %v756 = vsel %vm692, %v736, 0.0
    %757 = vadd.xlane.f32.xlu0 %v756
    %v758 = vpop.xlane.xlu0 %757
    %v759 = vsel %vm692, %v738, 0.0
    %760 = vadd.xlane.f32.xlu0 %v759
    %v761 = vpop.xlane.xlu0 %760
    %v762 = vsel %vm692, %v740, 0.0
    %763 = vadd.xlane.f32.xlu0 %v762
    %v764 = vpop.xlane.xlu0 %763
    %v765 = vrcp.pop %v743
    %v766 = vrcp.pop %v746
    %v767 = vrcp.pop %v749
    %v768 = vrcp.pop %v752
    %v769 = vrcp.pop %v755
    %v770 = vrcp.pop %v758
    %v771 = vrcp.pop %v761
    %v772 = vrcp.pop %v764
    %v773 = vmul.f32 %v726, %v765
    %v774 = vmul.f32 %v728, %v766
    %v775 = vmul.f32 %v730, %v767
    %v776 = vmul.f32 %v732, %v768
    %v777 = vmul.f32 %v734, %v769
    %v778 = vmul.f32 %v736, %v770
    %v779 = vmul.f32 %v738, %v771
    %v780 = vmul.f32 %v740, %v772
    %v781 = vpack.c.bf16 %v773, %v773
    %v782 = vpack.c.bf16 %v774, %v774
    %v783 = vpack.c.bf16 %v775, %v775
    %v784 = vpack.c.bf16 %v776, %v776
    %v785 = vpack.c.bf16 %v777, %v777
    %v786 = vpack.c.bf16 %v778, %v778
    %v787 = vpack.c.bf16 %v779, %v779
    %v788 = vpack.c.bf16 %v780, %v780
    %v790 = vsel %vm692, %v781, 0
    %vm792 = vcmask 1043456
    %v794 = vsel %vm792, %v283, 0
    %796 = vmatprep.subr.bf16.mxu0 0
    %797 = vmatpush1.bf16.msra.mxu0 0
    %798 = vmatprep.subr.bf16.mxu0 0
    %799 = vmatpush1.bf16.msra.mxu0 0
    %800 = vmatprep.subr.bf16.mxu0 0
    %801 = vmatpush1.bf16.msra.mxu0 0
    %802 = vmatprep.subr.bf16.mxu0 0
    %803 = vmatpush1.bf16.msra.mxu0 0
    %804 = vmatprep.subr.bf16.mxu0 0
    %805 = vmatpush1.bf16.msra.mxu0 0
    %806 = vmatprep.subr.bf16.mxu0 0
    %807 = vmatpush1.bf16.msra.mxu0 0
    %808 = vmatprep.subr.bf16.mxu0 0
    %809 = vmatpush1.bf16.msra.mxu0 0
    %810 = vmatprep.subr.bf16.mxu0 0
    %811 = vmatpush1.bf16.msra.mxu0 %v794
    %812 = vmatprep.subr.bf16.mxu0 0
    %813 = vmatpush2.bf16.msra.mxu0 0
    %814 = vmatprep.subr.bf16.mxu0 0
    %815 = vmatpush2.bf16.msra.mxu0 0
    %816 = vmatprep.subr.bf16.mxu0 0
    %817 = vmatpush2.bf16.msra.mxu0 0
    %818 = vmatprep.subr.bf16.mxu0 0
    %819 = vmatpush2.bf16.msra.mxu0 0
    %820 = vmatprep.subr.bf16.mxu0 0
    %821 = vmatpush2.bf16.msra.mxu0 0
    %822 = vmatprep.subr.bf16.mxu0 0
    %823 = vmatpush2.bf16.msra.mxu0 0
    %824 = vmatprep.subr.bf16.mxu0 0
    %825 = vmatpush2.bf16.msra.mxu0 0
    %826 = vmatprep.subr.bf16.mxu0 0
    %827 = vmatpush2.bf16.msra.mxu0 0
    %828 = vmatprep.mubr.bf16.mxu0 0
    %829 = vmatmul.mubr.bf16.gmra.mxu0 %v790
    %v830 = vpop.f32.mrf.mxu0
    %v831 = vadd.f32 0.0, %v830
    %v832 = vpop.f32.mrf.mxu0
    %v833 = vpop.f32.mrf.mxu0
    %v834 = vpop.f32.mrf.mxu0
    %835 = vdwg.mxu0
    %v837 = vsel %vm692, %v782, 0
    %v840 = vsel %vm792, %v284, 0
    %842 = vmatprep.subr.bf16.mxu0 0
    %843 = vmatpush1.bf16.msra.mxu0 0
    %844 = vmatprep.subr.bf16.mxu0 0
    %845 = vmatpush1.bf16.msra.mxu0 0
    %846 = vmatprep.subr.bf16.mxu0 0
    %847 = vmatpush1.bf16.msra.mxu0 0
    %848 = vmatprep.subr.bf16.mxu0 0
    %849 = vmatpush1.bf16.msra.mxu0 0
    %850 = vmatprep.subr.bf16.mxu0 0
    %851 = vmatpush1.bf16.msra.mxu0 0
    %852 = vmatprep.subr.bf16.mxu0 0
    %853 = vmatpush1.bf16.msra.mxu0 0
    %854 = vmatprep.subr.bf16.mxu0 0
    %855 = vmatpush1.bf16.msra.mxu0 0
    %856 = vmatprep.subr.bf16.mxu0 0
    %857 = vmatpush1.bf16.msra.mxu0 %v840
    %858 = vmatprep.subr.bf16.mxu0 0
    %859 = vmatpush2.bf16.msra.mxu0 0
    %860 = vmatprep.subr.bf16.mxu0 0
    %861 = vmatpush2.bf16.msra.mxu0 0
    %862 = vmatprep.subr.bf16.mxu0 0
    %863 = vmatpush2.bf16.msra.mxu0 0
    %864 = vmatprep.subr.bf16.mxu0 0
    %865 = vmatpush2.bf16.msra.mxu0 0
    %866 = vmatprep.subr.bf16.mxu0 0
    %867 = vmatpush2.bf16.msra.mxu0 0
    %868 = vmatprep.subr.bf16.mxu0 0
    %869 = vmatpush2.bf16.msra.mxu0 0
    %870 = vmatprep.subr.bf16.mxu0 0
    %871 = vmatpush2.bf16.msra.mxu0 0
    %872 = vmatprep.subr.bf16.mxu0 0
    %873 = vmatpush2.bf16.msra.mxu0 0
    %874 = vmatprep.mubr.bf16.mxu0 0
    %875 = vmatmul.mubr.bf16.gmra.mxu0 %v837
    %v876 = vpop.f32.mrf.mxu0
    %v877 = vadd.f32 0.0, %v876
    %v878 = vpop.f32.mrf.mxu0
    %v879 = vpop.f32.mrf.mxu0
    %v880 = vpop.f32.mrf.mxu0
    %881 = vdwg.mxu0
    %883 = vrot.lane.b32.xlu0 %v283, 112
    %v884 = vpop.permute.xlu0 %883
    %v886 = vsel %vm692, %v783, 0
    %v889 = vsel %vm792, %v884, 0
    %891 = vmatprep.subr.bf16.mxu0 0
    %892 = vmatpush1.bf16.msra.mxu0 0
    %893 = vmatprep.subr.bf16.mxu0 0
    %894 = vmatpush1.bf16.msra.mxu0 0
    %895 = vmatprep.subr.bf16.mxu0 0
    %896 = vmatpush1.bf16.msra.mxu0 0
    %897 = vmatprep.subr.bf16.mxu0 0
    %898 = vmatpush1.bf16.msra.mxu0 0
    %899 = vmatprep.subr.bf16.mxu0 0
    %900 = vmatpush1.bf16.msra.mxu0 0
    %901 = vmatprep.subr.bf16.mxu0 0
    %902 = vmatpush1.bf16.msra.mxu0 0
    %903 = vmatprep.subr.bf16.mxu0 0
    %904 = vmatpush1.bf16.msra.mxu0 0
    %905 = vmatprep.subr.bf16.mxu0 0
    %906 = vmatpush1.bf16.msra.mxu0 %v889
    %907 = vmatprep.subr.bf16.mxu0 0
    %908 = vmatpush2.bf16.msra.mxu0 0
    %909 = vmatprep.subr.bf16.mxu0 0
    %910 = vmatpush2.bf16.msra.mxu0 0
    %911 = vmatprep.subr.bf16.mxu0 0
    %912 = vmatpush2.bf16.msra.mxu0 0
    %913 = vmatprep.subr.bf16.mxu0 0
    %914 = vmatpush2.bf16.msra.mxu0 0
    %915 = vmatprep.subr.bf16.mxu0 0
    %916 = vmatpush2.bf16.msra.mxu0 0
    %917 = vmatprep.subr.bf16.mxu0 0
    %918 = vmatpush2.bf16.msra.mxu0 0
    %919 = vmatprep.subr.bf16.mxu0 0
    %920 = vmatpush2.bf16.msra.mxu0 0
    %921 = vmatprep.subr.bf16.mxu0 0
    %922 = vmatpush2.bf16.msra.mxu0 0
    %923 = vmatprep.mubr.bf16.mxu0 0
    %924 = vmatmul.mubr.bf16.gmra.mxu0 %v886
    %v925 = vpop.f32.mrf.mxu0
    %v926 = vadd.f32 0.0, %v925
    %v927 = vpop.f32.mrf.mxu0
    %v928 = vpop.f32.mrf.mxu0
    %v929 = vpop.f32.mrf.mxu0
    %930 = vdwg.mxu0
    %932 = vrot.lane.b32.xlu0 %v284, 112
    %v933 = vpop.permute.xlu0 %932
    %v935 = vsel %vm692, %v784, 0
    %v938 = vsel %vm792, %v933, 0
    %940 = vmatprep.subr.bf16.mxu0 0
    %941 = vmatpush1.bf16.msra.mxu0 0
    %942 = vmatprep.subr.bf16.mxu0 0
    %943 = vmatpush1.bf16.msra.mxu0 0
    %944 = vmatprep.subr.bf16.mxu0 0
    %945 = vmatpush1.bf16.msra.mxu0 0
    %946 = vmatprep.subr.bf16.mxu0 0
    %947 = vmatpush1.bf16.msra.mxu0 0
    %948 = vmatprep.subr.bf16.mxu0 0
    %949 = vmatpush1.bf16.msra.mxu0 0
    %950 = vmatprep.subr.bf16.mxu0 0
    %951 = vmatpush1.bf16.msra.mxu0 0
    %952 = vmatprep.subr.bf16.mxu0 0
    %953 = vmatpush1.bf16.msra.mxu0 0
    %954 = vmatprep.subr.bf16.mxu0 0
    %955 = vmatpush1.bf16.msra.mxu0 %v938
    %956 = vmatprep.subr.bf16.mxu0 0
    %957 = vmatpush2.bf16.msra.mxu0 0
    %958 = vmatprep.subr.bf16.mxu0 0
    %959 = vmatpush2.bf16.msra.mxu0 0
    %960 = vmatprep.subr.bf16.mxu0 0
    %961 = vmatpush2.bf16.msra.mxu0 0
    %962 = vmatprep.subr.bf16.mxu0 0
    %963 = vmatpush2.bf16.msra.mxu0 0
    %964 = vmatprep.subr.bf16.mxu0 0
    %965 = vmatpush2.bf16.msra.mxu0 0
    %966 = vmatprep.subr.bf16.mxu0 0
    %967 = vmatpush2.bf16.msra.mxu0 0
    %968 = vmatprep.subr.bf16.mxu0 0
    %969 = vmatpush2.bf16.msra.mxu0 0
    %970 = vmatprep.subr.bf16.mxu0 0
    %971 = vmatpush2.bf16.msra.mxu0 0
    %972 = vmatprep.mubr.bf16.mxu0 0
    %973 = vmatmul.mubr.bf16.gmra.mxu0 %v935
    %v974 = vpop.f32.mrf.mxu0
    %v975 = vadd.f32 0.0, %v974
    %v976 = vpop.f32.mrf.mxu0
    %v977 = vpop.f32.mrf.mxu0
    %v978 = vpop.f32.mrf.mxu0
    %979 = vdwg.mxu0
    %980 = vrot.lane.b32.xlu0 %v283, 96
    %v981 = vpop.permute.xlu0 %980
    %v983 = vsel %vm692, %v785, 0
    %v986 = vsel %vm792, %v981, 0
    %988 = vmatprep.subr.bf16.mxu0 0
    %989 = vmatpush1.bf16.msra.mxu0 0
    %990 = vmatprep.subr.bf16.mxu0 0
    %991 = vmatpush1.bf16.msra.mxu0 0
    %992 = vmatprep.subr.bf16.mxu0 0
    %993 = vmatpush1.bf16.msra.mxu0 0
    %994 = vmatprep.subr.bf16.mxu0 0
    %995 = vmatpush1.bf16.msra.mxu0 0
    %996 = vmatprep.subr.bf16.mxu0 0
    %997 = vmatpush1.bf16.msra.mxu0 0
    %998 = vmatprep.subr.bf16.mxu0 0
    %999 = vmatpush1.bf16.msra.mxu0 0
    %1000 = vmatprep.subr.bf16.mxu0 0
    %1001 = vmatpush1.bf16.msra.mxu0 0
    %1002 = vmatprep.subr.bf16.mxu0 0
    %1003 = vmatpush1.bf16.msra.mxu0 %v986
    %1004 = vmatprep.subr.bf16.mxu0 0
    %1005 = vmatpush2.bf16.msra.mxu0 0
    %1006 = vmatprep.subr.bf16.mxu0 0
    %1007 = vmatpush2.bf16.msra.mxu0 0
    %1008 = vmatprep.subr.bf16.mxu0 0
    %1009 = vmatpush2.bf16.msra.mxu0 0
    %1010 = vmatprep.subr.bf16.mxu0 0
    %1011 = vmatpush2.bf16.msra.mxu0 0
    %1012 = vmatprep.subr.bf16.mxu0 0
    %1013 = vmatpush2.bf16.msra.mxu0 0
    %1014 = vmatprep.subr.bf16.mxu0 0
    %1015 = vmatpush2.bf16.msra.mxu0 0
    %1016 = vmatprep.subr.bf16.mxu0 0
    %1017 = vmatpush2.bf16.msra.mxu0 0
    %1018 = vmatprep.subr.bf16.mxu0 0
    %1019 = vmatpush2.bf16.msra.mxu0 0
    %1020 = vmatprep.mubr.bf16.mxu0 0
    %1021 = vmatmul.mubr.bf16.gmra.mxu0 %v983
    %v1022 = vpop.f32.mrf.mxu0
    %v1023 = vadd.f32 0.0, %v1022
    %v1024 = vpop.f32.mrf.mxu0
    %v1025 = vpop.f32.mrf.mxu0
    %v1026 = vpop.f32.mrf.mxu0
    %1027 = vdwg.mxu0
    %1028 = vrot.lane.b32.xlu0 %v284, 96
    %v1029 = vpop.permute.xlu0 %1028
    %v1031 = vsel %vm692, %v786, 0
    %v1034 = vsel %vm792, %v1029, 0
    %1036 = vmatprep.subr.bf16.mxu0 0
    %1037 = vmatpush1.bf16.msra.mxu0 0
    %1038 = vmatprep.subr.bf16.mxu0 0
    %1039 = vmatpush1.bf16.msra.mxu0 0
    %1040 = vmatprep.subr.bf16.mxu0 0
    %1041 = vmatpush1.bf16.msra.mxu0 0
    %1042 = vmatprep.subr.bf16.mxu0 0
    %1043 = vmatpush1.bf16.msra.mxu0 0
    %1044 = vmatprep.subr.bf16.mxu0 0
    %1045 = vmatpush1.bf16.msra.mxu0 0
    %1046 = vmatprep.subr.bf16.mxu0 0
    %1047 = vmatpush1.bf16.msra.mxu0 0
    %1048 = vmatprep.subr.bf16.mxu0 0
    %1049 = vmatpush1.bf16.msra.mxu0 0
    %1050 = vmatprep.subr.bf16.mxu0 0
    %1051 = vmatpush1.bf16.msra.mxu0 %v1034
    %1052 = vmatprep.subr.bf16.mxu0 0
    %1053 = vmatpush2.bf16.msra.mxu0 0
    %1054 = vmatprep.subr.bf16.mxu0 0
    %1055 = vmatpush2.bf16.msra.mxu0 0
    %1056 = vmatprep.subr.bf16.mxu0 0
    %1057 = vmatpush2.bf16.msra.mxu0 0
    %1058 = vmatprep.subr.bf16.mxu0 0
    %1059 = vmatpush2.bf16.msra.mxu0 0
    %1060 = vmatprep.subr.bf16.mxu0 0
    %1061 = vmatpush2.bf16.msra.mxu0 0
    %1062 = vmatprep.subr.bf16.mxu0 0
    %1063 = vmatpush2.bf16.msra.mxu0 0
    %1064 = vmatprep.subr.bf16.mxu0 0
    %1065 = vmatpush2.bf16.msra.mxu0 0
    %1066 = vmatprep.subr.bf16.mxu0 0
    %1067 = vmatpush2.bf16.msra.mxu0 0
    %1068 = vmatprep.mubr.bf16.mxu0 0
    %1069 = vmatmul.mubr.bf16.gmra.mxu0 %v1031
    %v1070 = vpop.f32.mrf.mxu0
    %v1071 = vadd.f32 0.0, %v1070
    %v1072 = vpop.f32.mrf.mxu0
    %v1073 = vpop.f32.mrf.mxu0
    %v1074 = vpop.f32.mrf.mxu0
    %1075 = vdwg.mxu0
    %1076 = vrot.lane.b32.xlu0 %v283, 80
    %v1077 = vpop.permute.xlu0 %1076
    %v1079 = vsel %vm692, %v787, 0
    %v1082 = vsel %vm792, %v1077, 0
    %1084 = vmatprep.subr.bf16.mxu0 0
    %1085 = vmatpush1.bf16.msra.mxu0 0
    %1086 = vmatprep.subr.bf16.mxu0 0
    %1087 = vmatpush1.bf16.msra.mxu0 0
    %1088 = vmatprep.subr.bf16.mxu0 0
    %1089 = vmatpush1.bf16.msra.mxu0 0
    %1090 = vmatprep.subr.bf16.mxu0 0
    %1091 = vmatpush1.bf16.msra.mxu0 0
    %1092 = vmatprep.subr.bf16.mxu0 0
    %1093 = vmatpush1.bf16.msra.mxu0 0
    %1094 = vmatprep.subr.bf16.mxu0 0
    %1095 = vmatpush1.bf16.msra.mxu0 0
    %1096 = vmatprep.subr.bf16.mxu0 0
    %1097 = vmatpush1.bf16.msra.mxu0 0
    %1098 = vmatprep.subr.bf16.mxu0 0
    %1099 = vmatpush1.bf16.msra.mxu0 %v1082
    %1100 = vmatprep.subr.bf16.mxu0 0
    %1101 = vmatpush2.bf16.msra.mxu0 0
    %1102 = vmatprep.subr.bf16.mxu0 0
    %1103 = vmatpush2.bf16.msra.mxu0 0
    %1104 = vmatprep.subr.bf16.mxu0 0
    %1105 = vmatpush2.bf16.msra.mxu0 0
    %1106 = vmatprep.subr.bf16.mxu0 0
    %1107 = vmatpush2.bf16.msra.mxu0 0
    %1108 = vmatprep.subr.bf16.mxu0 0
    %1109 = vmatpush2.bf16.msra.mxu0 0
    %1110 = vmatprep.subr.bf16.mxu0 0
    %1111 = vmatpush2.bf16.msra.mxu0 0
    %1112 = vmatprep.subr.bf16.mxu0 0
    %1113 = vmatpush2.bf16.msra.mxu0 0
    %1114 = vmatprep.subr.bf16.mxu0 0
    %1115 = vmatpush2.bf16.msra.mxu0 0
    %1116 = vmatprep.mubr.bf16.mxu0 0
    %1117 = vmatmul.mubr.bf16.gmra.mxu0 %v1079
    %v1118 = vpop.f32.mrf.mxu0
    %v1119 = vadd.f32 0.0, %v1118
    %v1120 = vpop.f32.mrf.mxu0
    %v1121 = vpop.f32.mrf.mxu0
    %v1122 = vpop.f32.mrf.mxu0
    %1123 = vdwg.mxu0
    %1124 = vrot.lane.b32.xlu0 %v284, 80
    %v1125 = vpop.permute.xlu0 %1124
    %v1127 = vsel %vm692, %v788, 0
    %v1130 = vsel %vm792, %v1125, 0
    %1132 = vmatprep.subr.bf16.mxu0 0
    %1133 = vmatpush1.bf16.msra.mxu0 0
    %1134 = vmatprep.subr.bf16.mxu0 0
    %1135 = vmatpush1.bf16.msra.mxu0 0
    %1136 = vmatprep.subr.bf16.mxu0 0
    %1137 = vmatpush1.bf16.msra.mxu0 0
    %1138 = vmatprep.subr.bf16.mxu0 0
    %1139 = vmatpush1.bf16.msra.mxu0 0
    %1140 = vmatprep.subr.bf16.mxu0 0
    %1141 = vmatpush1.bf16.msra.mxu0 0
    %1142 = vmatprep.subr.bf16.mxu0 0
    %1143 = vmatpush1.bf16.msra.mxu0 0
    %1144 = vmatprep.subr.bf16.mxu0 0
    %1145 = vmatpush1.bf16.msra.mxu0 0
    %1146 = vmatprep.subr.bf16.mxu0 0
    %1147 = vmatpush1.bf16.msra.mxu0 %v1130
    %1148 = vmatprep.subr.bf16.mxu0 0
    %1149 = vmatpush2.bf16.msra.mxu0 0
    %1150 = vmatprep.subr.bf16.mxu0 0
    %1151 = vmatpush2.bf16.msra.mxu0 0
    %1152 = vmatprep.subr.bf16.mxu0 0
    %1153 = vmatpush2.bf16.msra.mxu0 0
    %1154 = vmatprep.subr.bf16.mxu0 0
    %1155 = vmatpush2.bf16.msra.mxu0 0
    %1156 = vmatprep.subr.bf16.mxu0 0
    %1157 = vmatpush2.bf16.msra.mxu0 0
    %1158 = vmatprep.subr.bf16.mxu0 0
    %1159 = vmatpush2.bf16.msra.mxu0 0
    %1160 = vmatprep.subr.bf16.mxu0 0
    %1161 = vmatpush2.bf16.msra.mxu0 0
    %1162 = vmatprep.subr.bf16.mxu0 0
    %1163 = vmatpush2.bf16.msra.mxu0 0
    %1164 = vmatprep.mubr.bf16.mxu0 0
    %1165 = vmatmul.mubr.bf16.gmra.mxu0 %v1127
    %v1166 = vpop.f32.mrf.mxu0
    %v1167 = vadd.f32 0.0, %v1166
    %v1168 = vpop.f32.mrf.mxu0
    %v1169 = vpop.f32.mrf.mxu0
    %v1170 = vpop.f32.mrf.mxu0
    %1171 = vdwg.mxu0
    %1174 = vrot.lane.b32.xlu0 %v926, 16
    %v1175 = vpop.permute.xlu0 %1174
    %1176 = vrot.lane.b32.xlu0 %v975, 16
    %v1177 = vpop.permute.xlu0 %1176
    %1182 = vrot.lane.b32.xlu0 %v1023, 32
    %v1183 = vpop.permute.xlu0 %1182
    %1184 = vrot.lane.b32.xlu0 %v1071, 32
    %v1185 = vpop.permute.xlu0 %1184
    %1190 = vrot.lane.b32.xlu0 %v1119, 48
    %v1191 = vpop.permute.xlu0 %1190
    %1192 = vrot.lane.b32.xlu0 %v1167, 48
    %v1193 = vpop.permute.xlu0 %1192
    %v1196 = vsel %vm288, %v831, %v1175
    %v1197 = vsel %vm288, %v877, %v1177
    %vm1198 = vcmask 261120
    %v1199 = vsel %vm1198, %v1196, %v1183
    %v1200 = vsel %vm1198, %v1197, %v1185
    %vm1201 = vcmask 392192
    %v1202 = vsel %vm1201, %v1199, %v1191
    %v1203 = vsel %vm1201, %v1200, %v1193
    %v1204 = vpack.c.bf16 %v1203, %v1202
    %v1205 = vld [vmem:[%s4] sm:$0xf]
    %v1206 = vld [vmem:[%s4 + $0x4] sm:$0xf]
    %v1207 = vld [vmem:[%s4 + $0x8] sm:$0xf]
    %v1208 = vld [vmem:[%s4 + $0xc] sm:$0xf]
    %v1209 = vld [vmem:[%s4 + $0x10] sm:$0xf]
    %v1210 = vld [vmem:[%s4 + $0x14] sm:$0xf]
    %v1211 = vld [vmem:[%s4 + $0x18] sm:$0xf]
    %v1212 = vld [vmem:[%s4 + $0x1c] sm:$0xf]
    %v1221 = vunpack.c.l.b16 %v1205
    %v1222 = vunpack.c.l.b16 %v1206
    %v1223 = vunpack.c.l.b16 %v1207
    %v1224 = vunpack.c.l.b16 %v1208
    %v1225 = vunpack.c.l.b16 %v1209
    %v1226 = vunpack.c.l.b16 %v1210
    %v1227 = vunpack.c.l.b16 %v1211
    %v1228 = vunpack.c.l.b16 %v1212
    %v1229 = vpack.c.b16 %v1222, %v1221
    %v1230 = vpack.c.b16 %v1224, %v1223
    %v1231 = vpack.c.b16 %v1226, %v1225
    %v1232 = vpack.c.b16 %v1228, %v1227
    %v1238 = vsel %vm75, %v1204, 0
    %1240 = vmatprep.subr.bf16.mxu0 0
    %1241 = vmatpush1.bf16.msra.mxu0 0
    %1242 = vmatprep.subr.bf16.mxu0 0
    %1243 = vmatpush1.bf16.msra.mxu0 0
    %1244 = vmatprep.subr.bf16.mxu0 0
    %1245 = vmatpush1.bf16.msra.mxu0 0
    %1246 = vmatprep.subr.bf16.mxu0 0
    %1247 = vmatpush1.bf16.msra.mxu0 0
    %1248 = vmatprep.subr.bf16.mxu0 0
    %1249 = vmatpush1.bf16.msra.mxu0 %v1232
    %1250 = vmatprep.subr.bf16.mxu0 0
    %1251 = vmatpush1.bf16.msra.mxu0 %v1231
    %1252 = vmatprep.subr.bf16.mxu0 0
    %1253 = vmatpush1.bf16.msra.mxu0 %v1230
    %1254 = vmatprep.subr.bf16.mxu0 0
    %1255 = vmatpush1.bf16.msra.mxu0 %v1229
    %1256 = vmatprep.subr.bf16.mxu0 0
    %1257 = vmatpush2.bf16.msra.mxu0 0
    %1258 = vmatprep.subr.bf16.mxu0 0
    %1259 = vmatpush2.bf16.msra.mxu0 0
    %1260 = vmatprep.subr.bf16.mxu0 0
    %1261 = vmatpush2.bf16.msra.mxu0 0
    %1262 = vmatprep.subr.bf16.mxu0 0
    %1263 = vmatpush2.bf16.msra.mxu0 0
    %1264 = vmatprep.subr.bf16.mxu0 0
    %1265 = vmatpush2.bf16.msra.mxu0 0
    %1266 = vmatprep.subr.bf16.mxu0 0
    %1267 = vmatpush2.bf16.msra.mxu0 0
    %1268 = vmatprep.subr.bf16.mxu0 0
    %1269 = vmatpush2.bf16.msra.mxu0 0
    %1270 = vmatprep.subr.bf16.mxu0 0
    %1271 = vmatpush2.bf16.msra.mxu0 0
    %1272 = vmatprep.mubr.bf16.mxu0 0
    %1273 = vmatmul.mubr.bf16.gmra.mxu0 %v1238
    %v1274 = vpop.f32.mrf.mxu0
    %v1275 = vadd.f32 0.0, %v1274
    %v1276 = vpop.f32.mrf.mxu0
    %v1277 = vpop.f32.mrf.mxu0
    %v1278 = vadd.f32 0.0, %v1277
    %v1279 = vpop.f32.mrf.mxu0
    %1280 = vdwg.mxu0
    %v1281 = vadd.f32 %v70, %v1275
    %v1282 = vadd.f32 %v71, %v1278
    %v1283 = vmul.f32 %v1281, %v1281
    %v1284 = vmul.f32 %v1282, %v1282
    %v1285 = vsel %vm75, %v1283, 0.0
    %1286 = vadd.xlane.f32.xlu0 %v1285
    %v1287 = vpop.xlane.xlu0 %1286
    %v1288 = vsel %vm75, %v1284, 0.0
    %1289 = vadd.xlane.f32.xlu0 %v1288
    %v1290 = vpop.xlane.xlu0 %1289
    %v1291 = vmul.f32 %v1287, %v82
    %v1292 = vmul.f32 %v1290, %v82
    %v1293 = vadd.f32 %v1291, 1e-05
    %v1294 = vadd.f32 %v1292, 1e-05
    %v1295 = vrsqrt.pop %v1293
    %v1296 = vrsqrt.pop %v1294
    %v1297 = vmul.f32 %v1281, %v1295
    %v1298 = vmul.f32 %v1282, %v1296
    %v1299 = vlaneseq
    %v1300 = vshrl.u32 %v1299, 7
    %v1301 = vsub.s32 2, %v1300
    %v1302 = vrot.slane %v72, %v1301
    %v1303 = vmul.f32 %v1297, %v1302
    %v1304 = vmul.f32 %v1298, %v1302
    %v1305 = vlaneseq
    %v1306 = vshrl.u32 %v1305, 7
    %v1307 = vsub.s32 3, %v1306
    %v1308 = vrot.slane %v72, %v1307
    %v1309 = vadd.f32 %v1303, %v1308
    %v1310 = vadd.f32 %v1304, %v1308
    %v1311 = vpack.c.bf16 %v1310, %v1309
    %v1312 = vld [vmem:[%s5] sm:$0xff]
    %v1313 = vld [vmem:[%s5 + $0x8] sm:$0xff]
    %v1314 = vld [vmem:[%s5 + $0x10] sm:$0xff]
    %v1315 = vld [vmem:[%s5 + $0x18] sm:$0xff]
    %v1316 = vld [vmem:[%s5 + $0x20] sm:$0xff]
    %v1317 = vld [vmem:[%s5 + $0x28] sm:$0xff]
    %v1318 = vld [vmem:[%s5 + $0x30] sm:$0xff]
    %v1319 = vld [vmem:[%s5 + $0x38] sm:$0xff]
    %v1320 = vld [vmem:[%s5 + $0x40] sm:$0xff]
    %v1321 = vld [vmem:[%s5 + $0x48] sm:$0xff]
    %v1322 = vld [vmem:[%s5 + $0x50] sm:$0xff]
    %v1323 = vld [vmem:[%s5 + $0x58] sm:$0xff]
    %v1324 = vld [vmem:[%s5 + $0x60] sm:$0xff]
    %v1325 = vld [vmem:[%s5 + $0x68] sm:$0xff]
    %v1326 = vld [vmem:[%s5 + $0x70] sm:$0xff]
    %v1327 = vld [vmem:[%s5 + $0x78] sm:$0xff]
    %v1328 = vld [vmem:[#allocation7] sm:$0xf]
    %v1330 = vlaneseq
    %v1331 = vshrl.u32 %v1330, 7
    %v1332 = vsub.s32 0, %v1331
    %v1333 = vrot.slane %v1328, %v1332
    %v1334 = vlaneseq
    %v1335 = vshrl.u32 %v1334, 7
    %v1336 = vsub.s32 1, %v1335
    %v1337 = vrot.slane %v1328, %v1336
    %v1338 = vlaneseq
    %v1339 = vshrl.u32 %v1338, 7
    %v1340 = vsub.s32 2, %v1339
    %v1341 = vrot.slane %v1328, %v1340
    %v1342 = vlaneseq
    %v1343 = vshrl.u32 %v1342, 7
    %v1344 = vsub.s32 3, %v1343
    %v1345 = vrot.slane %v1328, %v1344
    %v1366 = vunpack.c.l.b16 %v1312
    %v1367 = vunpack.c.h.b16 %v1312
    %v1368 = vunpack.c.l.b16 %v1313
    %v1369 = vunpack.c.h.b16 %v1313
    %v1370 = vunpack.c.l.b16 %v1314
    %v1371 = vunpack.c.h.b16 %v1314
    %v1372 = vunpack.c.l.b16 %v1315
    %v1373 = vunpack.c.h.b16 %v1315
    %v1374 = vunpack.c.l.b16 %v1316
    %v1375 = vunpack.c.h.b16 %v1316
    %v1376 = vunpack.c.l.b16 %v1317
    %v1377 = vunpack.c.h.b16 %v1317
    %v1378 = vunpack.c.l.b16 %v1318
    %v1379 = vunpack.c.h.b16 %v1318
    %v1380 = vunpack.c.l.b16 %v1319
    %v1381 = vunpack.c.h.b16 %v1319
    %v1382 = vunpack.c.l.b16 %v1320
    %v1383 = vunpack.c.h.b16 %v1320
    %v1384 = vunpack.c.l.b16 %v1321
    %v1385 = vunpack.c.h.b16 %v1321
    %v1386 = vunpack.c.l.b16 %v1322
    %v1387 = vunpack.c.h.b16 %v1322
    %v1388 = vunpack.c.l.b16 %v1323
    %v1389 = vunpack.c.h.b16 %v1323
    %v1390 = vunpack.c.l.b16 %v1324
    %v1391 = vunpack.c.h.b16 %v1324
    %v1392 = vunpack.c.l.b16 %v1325
    %v1393 = vunpack.c.h.b16 %v1325
    %v1394 = vunpack.c.l.b16 %v1326
    %v1395 = vunpack.c.h.b16 %v1326
    %v1396 = vunpack.c.l.b16 %v1327
    %v1397 = vunpack.c.h.b16 %v1327
    %v1398 = vpack.c.b16 %v1370, %v1366
    %v1399 = vpack.c.b16 %v1371, %v1367
    %v1400 = vpack.c.b16 %v1372, %v1368
    %v1401 = vpack.c.b16 %v1373, %v1369
    %v1402 = vpack.c.b16 %v1378, %v1374
    %v1403 = vpack.c.b16 %v1379, %v1375
    %v1404 = vpack.c.b16 %v1380, %v1376
    %v1405 = vpack.c.b16 %v1381, %v1377
    %v1406 = vpack.c.b16 %v1386, %v1382
    %v1407 = vpack.c.b16 %v1387, %v1383
    %v1408 = vpack.c.b16 %v1388, %v1384
    %v1409 = vpack.c.b16 %v1389, %v1385
    %v1410 = vpack.c.b16 %v1394, %v1390
    %v1411 = vpack.c.b16 %v1395, %v1391
    %v1412 = vpack.c.b16 %v1396, %v1392
    %v1413 = vpack.c.b16 %v1397, %v1393
    %v1431 = vsel %vm75, %v1311, 0
    %1433 = vmatprep.subr.bf16.mxu0 0
    %1434 = vmatpush1.bf16.msra.mxu0 0
    %1435 = vmatprep.subr.bf16.mxu0 0
    %1436 = vmatpush1.bf16.msra.mxu0 0
    %1437 = vmatprep.subr.bf16.mxu0 0
    %1438 = vmatpush1.bf16.msra.mxu0 0
    %1439 = vmatprep.subr.bf16.mxu0 0
    %1440 = vmatpush1.bf16.msra.mxu0 0
    %1441 = vmatprep.subr.bf16.mxu0 %v1411
    %1442 = vmatpush1.bf16.msra.mxu0 %v1410
    %1443 = vmatprep.subr.bf16.mxu0 %v1407
    %1444 = vmatpush1.bf16.msra.mxu0 %v1406
    %1445 = vmatprep.subr.bf16.mxu0 %v1403
    %1446 = vmatpush1.bf16.msra.mxu0 %v1402
    %1447 = vmatprep.subr.bf16.mxu0 %v1399
    %1448 = vmatpush1.bf16.msra.mxu0 %v1398
    %1449 = vmatprep.subr.bf16.mxu0 0
    %1450 = vmatpush2.bf16.msra.mxu0 0
    %1451 = vmatprep.subr.bf16.mxu0 0
    %1452 = vmatpush2.bf16.msra.mxu0 0
    %1453 = vmatprep.subr.bf16.mxu0 0
    %1454 = vmatpush2.bf16.msra.mxu0 0
    %1455 = vmatprep.subr.bf16.mxu0 0
    %1456 = vmatpush2.bf16.msra.mxu0 0
    %1457 = vmatprep.subr.bf16.mxu0 0
    %1458 = vmatpush2.bf16.msra.mxu0 0
    %1459 = vmatprep.subr.bf16.mxu0 0
    %1460 = vmatpush2.bf16.msra.mxu0 0
    %1461 = vmatprep.subr.bf16.mxu0 0
    %1462 = vmatpush2.bf16.msra.mxu0 0
    %1463 = vmatprep.subr.bf16.mxu0 0
    %1464 = vmatpush2.bf16.msra.mxu0 0
    %1465 = vmatprep.mubr.bf16.mxu0 0
    %1466 = vmatmul.mubr.bf16.gmra.mxu0 %v1431
    %v1467 = vpop.f32.mrf.mxu0
    %v1468 = vadd.f32 %v1333, %v1467
    %v1469 = vpop.f32.mrf.mxu0
    %v1470 = vadd.f32 %v1337, %v1469
    %v1471 = vpop.f32.mrf.mxu0
    %v1472 = vadd.f32 %v1333, %v1471
    %v1473 = vpop.f32.mrf.mxu0
    %v1474 = vadd.f32 %v1337, %v1473
    %1475 = vdwg.mxu0
    %1476 = vmatprep.subr.bf16.mxu0 0
    %1477 = vmatpush1.bf16.msra.mxu0 0
    %1478 = vmatprep.subr.bf16.mxu0 0
    %1479 = vmatpush1.bf16.msra.mxu0 0
    %1480 = vmatprep.subr.bf16.mxu0 0
    %1481 = vmatpush1.bf16.msra.mxu0 0
    %1482 = vmatprep.subr.bf16.mxu0 0
    %1483 = vmatpush1.bf16.msra.mxu0 0
    %1484 = vmatprep.subr.bf16.mxu0 %v1413
    %1485 = vmatpush1.bf16.msra.mxu0 %v1412
    %1486 = vmatprep.subr.bf16.mxu0 %v1409
    %1487 = vmatpush1.bf16.msra.mxu0 %v1408
    %1488 = vmatprep.subr.bf16.mxu0 %v1405
    %1489 = vmatpush1.bf16.msra.mxu0 %v1404
    %1490 = vmatprep.subr.bf16.mxu0 %v1401
    %1491 = vmatpush1.bf16.msra.mxu0 %v1400
    %1492 = vmatprep.subr.bf16.mxu0 0
    %1493 = vmatpush2.bf16.msra.mxu0 0
    %1494 = vmatprep.subr.bf16.mxu0 0
    %1495 = vmatpush2.bf16.msra.mxu0 0
    %1496 = vmatprep.subr.bf16.mxu0 0
    %1497 = vmatpush2.bf16.msra.mxu0 0
    %1498 = vmatprep.subr.bf16.mxu0 0
    %1499 = vmatpush2.bf16.msra.mxu0 0
    %1500 = vmatprep.subr.bf16.mxu0 0
    %1501 = vmatpush2.bf16.msra.mxu0 0
    %1502 = vmatprep.subr.bf16.mxu0 0
    %1503 = vmatpush2.bf16.msra.mxu0 0
    %1504 = vmatprep.subr.bf16.mxu0 0
    %1505 = vmatpush2.bf16.msra.mxu0 0
    %1506 = vmatprep.subr.bf16.mxu0 0
    %1507 = vmatpush2.bf16.msra.mxu0 0
    %1508 = vmatprep.mubr.bf16.mxu0 0
    %1509 = vmatmul.mubr.bf16.gmra.mxu0 %v1431
    %v1510 = vpop.f32.mrf.mxu0
    %v1511 = vadd.f32 %v1341, %v1510
    %v1512 = vpop.f32.mrf.mxu0
    %v1513 = vadd.f32 %v1345, %v1512
    %v1514 = vpop.f32.mrf.mxu0
    %v1515 = vadd.f32 %v1341, %v1514
    %v1516 = vpop.f32.mrf.mxu0
    %v1517 = vadd.f32 %v1345, %v1516
    %1518 = vdwg.mxu0
    %v1519 = vxor.u32 %v1468, 2147483648
    %v1520 = vxor.u32 %v1470, 2147483648
    %v1521 = vxor.u32 %v1472, 2147483648
    %v1522 = vxor.u32 %v1474, 2147483648
    %v1523 = vmul.f32 %v1519, 1.442695
    %v1524 = vpow.pop %v1523
    %v1525 = vmul.f32 %v1520, 1.442695
    %v1526 = vpow.pop %v1525
    %v1527 = vmul.f32 %v1521, 1.442695
    %v1528 = vpow.pop %v1527
    %v1529 = vmul.f32 %v1522, 1.442695
    %v1530 = vpow.pop %v1529
    %v1531 = vadd.f32 %v1524, 1.0
    %v1532 = vadd.f32 %v1526, 1.0
    %v1533 = vadd.f32 %v1528, 1.0
    %v1534 = vadd.f32 %v1530, 1.0
    %v1535 = vrcp.pop %v1531
    %v1536 = vmul.f32 1.0, %v1535
    %v1537 = vrcp.pop %v1532
    %v1538 = vmul.f32 1.0, %v1537
    %v1539 = vrcp.pop %v1533
    %v1540 = vmul.f32 1.0, %v1539
    %v1541 = vrcp.pop %v1534
    %v1542 = vmul.f32 1.0, %v1541
    %v1543 = vmul.f32 %v1468, %v1536
    %v1544 = vmul.f32 %v1470, %v1538
    %v1545 = vmul.f32 %v1472, %v1540
    %v1546 = vmul.f32 %v1474, %v1542
    %v1547 = vmul.f32 %v1543, %v1511
    %v1548 = vmul.f32 %v1544, %v1513
    %v1549 = vmul.f32 %v1545, %v1515
    %v1550 = vmul.f32 %v1546, %v1517
    %v1551 = vpack.c.bf16 %v1549, %v1547
    %v1552 = vpack.c.bf16 %v1550, %v1548
    %v1553 = vld [vmem:[%s7] sm:$0xf]
    %v1554 = vld [vmem:[%s7 + $0x4] sm:$0xf]
    %v1555 = vld [vmem:[%s7 + $0x8] sm:$0xf]
    %v1556 = vld [vmem:[%s7 + $0xc] sm:$0xf]
    %v1557 = vld [vmem:[%s7 + $0x10] sm:$0xf]
    %v1558 = vld [vmem:[%s7 + $0x14] sm:$0xf]
    %v1559 = vld [vmem:[%s7 + $0x18] sm:$0xf]
    %v1560 = vld [vmem:[%s7 + $0x1c] sm:$0xf]
    %v1561 = vld [vmem:[%s7 + $0x20] sm:$0xf]
    %v1562 = vld [vmem:[%s7 + $0x24] sm:$0xf]
    %v1563 = vld [vmem:[%s7 + $0x28] sm:$0xf]
    %v1564 = vld [vmem:[%s7 + $0x2c] sm:$0xf]
    %v1565 = vld [vmem:[%s7 + $0x30] sm:$0xf]
    %v1566 = vld [vmem:[%s7 + $0x34] sm:$0xf]
    %v1567 = vld [vmem:[%s7 + $0x38] sm:$0xf]
    %v1568 = vld [vmem:[%s7 + $0x3c] sm:$0xf]
    %v1569 = vld [vmem:[%s7 + $0x40] sm:$0xf]
    %v1570 = vld [vmem:[%s7 + $0x44] sm:$0xf]
    %v1571 = vld [vmem:[%s7 + $0x48] sm:$0xf]
    %v1572 = vld [vmem:[%s7 + $0x4c] sm:$0xf]
    %v1573 = vld [vmem:[%s7 + $0x50] sm:$0xf]
    %v1574 = vld [vmem:[%s7 + $0x54] sm:$0xf]
    %v1575 = vld [vmem:[%s7 + $0x58] sm:$0xf]
    %v1576 = vld [vmem:[%s7 + $0x5c] sm:$0xf]
    %v1577 = vld [vmem:[%s7 + $0x60] sm:$0xf]
    %v1578 = vld [vmem:[%s7 + $0x64] sm:$0xf]
    %v1579 = vld [vmem:[%s7 + $0x68] sm:$0xf]
    %v1580 = vld [vmem:[%s7 + $0x6c] sm:$0xf]
    %v1581 = vld [vmem:[%s7 + $0x70] sm:$0xf]
    %v1582 = vld [vmem:[%s7 + $0x74] sm:$0xf]
    %v1583 = vld [vmem:[%s7 + $0x78] sm:$0xf]
    %v1584 = vld [vmem:[%s7 + $0x7c] sm:$0xf]
    %v1585 = vlaneseq
    %v1586 = vshrl.u32 %v1585, 7
    %v1587 = vsub.s32 4, %v1586
    %v1588 = vrot.slane %v72, %v1587
    %v1621 = vunpack.c.l.b16 %v1553
    %v1622 = vunpack.c.l.b16 %v1554
    %v1623 = vunpack.c.l.b16 %v1555
    %v1624 = vunpack.c.l.b16 %v1556
    %v1625 = vunpack.c.l.b16 %v1557
    %v1626 = vunpack.c.l.b16 %v1558
    %v1627 = vunpack.c.l.b16 %v1559
    %v1628 = vunpack.c.l.b16 %v1560
    %v1629 = vunpack.c.l.b16 %v1561
    %v1630 = vunpack.c.l.b16 %v1562
    %v1631 = vunpack.c.l.b16 %v1563
    %v1632 = vunpack.c.l.b16 %v1564
    %v1633 = vunpack.c.l.b16 %v1565
    %v1634 = vunpack.c.l.b16 %v1566
    %v1635 = vunpack.c.l.b16 %v1567
    %v1636 = vunpack.c.l.b16 %v1568
    %v1637 = vunpack.c.l.b16 %v1569
    %v1638 = vunpack.c.l.b16 %v1570
    %v1639 = vunpack.c.l.b16 %v1571
    %v1640 = vunpack.c.l.b16 %v1572
    %v1641 = vunpack.c.l.b16 %v1573
    %v1642 = vunpack.c.l.b16 %v1574
    %v1643 = vunpack.c.l.b16 %v1575
    %v1644 = vunpack.c.l.b16 %v1576
    %v1645 = vunpack.c.l.b16 %v1577
    %v1646 = vunpack.c.l.b16 %v1578
    %v1647 = vunpack.c.l.b16 %v1579
    %v1648 = vunpack.c.l.b16 %v1580
    %v1649 = vunpack.c.l.b16 %v1581
    %v1650 = vunpack.c.l.b16 %v1582
    %v1651 = vunpack.c.l.b16 %v1583
    %v1652 = vunpack.c.l.b16 %v1584
    %v1653 = vpack.c.b16 %v1622, %v1621
    %v1654 = vpack.c.b16 %v1624, %v1623
    %v1655 = vpack.c.b16 %v1626, %v1625
    %v1656 = vpack.c.b16 %v1628, %v1627
    %v1657 = vpack.c.b16 %v1630, %v1629
    %v1658 = vpack.c.b16 %v1632, %v1631
    %v1659 = vpack.c.b16 %v1634, %v1633
    %v1660 = vpack.c.b16 %v1636, %v1635
    %v1661 = vpack.c.b16 %v1638, %v1637
    %v1662 = vpack.c.b16 %v1640, %v1639
    %v1663 = vpack.c.b16 %v1642, %v1641
    %v1664 = vpack.c.b16 %v1644, %v1643
    %v1665 = vpack.c.b16 %v1646, %v1645
    %v1666 = vpack.c.b16 %v1648, %v1647
    %v1667 = vpack.c.b16 %v1650, %v1649
    %v1668 = vpack.c.b16 %v1652, %v1651
    %1685 = vmatprep.subr.bf16.mxu0 0
    %1686 = vmatpush1.bf16.msra.mxu0 %v1660
    %1687 = vmatprep.subr.bf16.mxu0 0
    %1688 = vmatpush1.bf16.msra.mxu0 %v1659
    %1689 = vmatprep.subr.bf16.mxu0 0
    %1690 = vmatpush1.bf16.msra.mxu0 %v1658
    %1691 = vmatprep.subr.bf16.mxu0 0
    %1692 = vmatpush1.bf16.msra.mxu0 %v1657
    %1693 = vmatprep.subr.bf16.mxu0 0
    %1694 = vmatpush1.bf16.msra.mxu0 %v1656
    %1695 = vmatprep.subr.bf16.mxu0 0
    %1696 = vmatpush1.bf16.msra.mxu0 %v1655
    %1697 = vmatprep.subr.bf16.mxu0 0
    %1698 = vmatpush1.bf16.msra.mxu0 %v1654
    %1699 = vmatprep.subr.bf16.mxu0 0
    %1700 = vmatpush1.bf16.msra.mxu0 %v1653
    %1701 = vmatprep.subr.bf16.mxu0 0
    %1702 = vmatpush2.bf16.msra.mxu0 %v1668
    %1703 = vmatprep.subr.bf16.mxu0 0
    %1704 = vmatpush2.bf16.msra.mxu0 %v1667
    %1705 = vmatprep.subr.bf16.mxu0 0
    %1706 = vmatpush2.bf16.msra.mxu0 %v1666
    %1707 = vmatprep.subr.bf16.mxu0 0
    %1708 = vmatpush2.bf16.msra.mxu0 %v1665
    %1709 = vmatprep.subr.bf16.mxu0 0
    %1710 = vmatpush2.bf16.msra.mxu0 %v1664
    %1711 = vmatprep.subr.bf16.mxu0 0
    %1712 = vmatpush2.bf16.msra.mxu0 %v1663
    %1713 = vmatprep.subr.bf16.mxu0 0
    %1714 = vmatpush2.bf16.msra.mxu0 %v1662
    %1715 = vmatprep.subr.bf16.mxu0 0
    %1716 = vmatpush2.bf16.msra.mxu0 %v1661
    %1717 = vmatprep.mubr.bf16.mxu0 %v1552
    %1718 = vmatmul.mubr.bf16.gmra.mxu0 %v1551
    %v1719 = vpop.f32.mrf.mxu0
    %v1720 = vadd.f32 %v1588, %v1719
    %v1721 = vpop.f32.mrf.mxu0
    %v1722 = vpop.f32.mrf.mxu0
    %v1723 = vadd.f32 %v1588, %v1722
    %v1724 = vpop.f32.mrf.mxu0
    %1725 = vdwg.mxu0
    %v1726 = vadd.f32 %v1281, %v1720
    %v1727 = vadd.f32 %v1282, %v1723
    %1728 = vst.msk [vmem:[#allocation8] sm:$0xff] %vm75, %v1726
    %1729 = vst.msk [vmem:[#allocation8 + $0x8] sm:$0xff] %vm75, %v1727
    // Predicated region
    $region46: #{encoder_block_pallas.1} parent=1 // pred_check
      _
    $region47: #{encoder_block_pallas.1} parent=1 // pred_check_branch
      %1731 = sbr.rel (0) target = $region49
    $region48: #{encoder_block_pallas.1} parent=1 // pred_region
      %s1733 = ssub.s32 256, 256
      %1734 = vsyncadd [#allocation4], %s1733
      %s1735 = sshll.u32 [#allocation8], 4
      %s1736 = int_to_ptr.vmem [resolvable:$true] %s1735
      %1741 = dma.vmem_to_hbm [thread:$0]  %s1736, 256, %s8, [#allocation4], 128, 128, 8
    $region49: #{encoder_block_pallas.1} parent=1 // pred_fallthru
      _
    // Predicated region
    $region50: #{encoder_block_pallas.1} parent=1 // pred_check
      _
    $region51: #{encoder_block_pallas.1} parent=1 // pred_check_branch
      %1743 = sbr.rel (0) target = $region53
    $region52: #{encoder_block_pallas.1} parent=1 // pred_region
      %1744 = dma.done [#allocation4], 256
    $region53: #{encoder_block_pallas.1} parent=1 // pred_fallthru
      _
    %1745 = vsyncpa [#allocation3], 1
    %1746 = vsyncpa [#allocation6], 1
    %1747 = vsyncpa [#allocation4], 1

</llo_original>
